<compile_context>
chip_gen: v6e
topology: v6e:2x2x1
jax: 0.10.0
libtpu: 0.0.40
codegen_flags: <defaults>
</compile_context>

<pallas_src>
import math
import functools

import jax
import jax.numpy as jnp
from jax import lax
from jax.experimental import pallas as pl
from jax.experimental.pallas import tpu as pltpu


def _triple(v):
    if isinstance(v, (tuple, list)):
        return tuple(v)
    return (v, v, v)


def _round_up(x, m):
    return ((x + m - 1) // m) * m


def _choose_tile(total128, cap, max_waste_frac=0.125):
    """Pick a 128-multiple tile t <= cap minimizing grid steps over total128 (total128 is a
    multiple of 128; it may be padded up to a multiple of t), with bounded padding waste."""
    cap = max(128, min(cap, total128))
    best_t, best_steps = 128, total128 // 128
    t = 128
    while t <= cap:
        padded = _round_up(total128, t)
        if padded - total128 <= int(total128 * max_waste_frac):
            steps = padded // t
            if steps < best_steps or (steps == best_steps and t > best_t):
                best_t, best_steps = t, steps
        t += 128
    return best_t


def _vmem_config():
    """(tile-sizing budget bytes, vmem_limit_bytes) chosen per TPU generation."""
    kind = ""
    try:
        kind = jax.devices()[0].device_kind.lower()
    except Exception:
        pass
    if ("v4" in kind or "v5" in kind or "v6" in kind) and "v7" not in kind:
        # 128 MiB VMEM parts: push tiles large, raise the scoped limit.
        return 64 * 1024 * 1024, 96 * 1024 * 1024
    # v7x (64 MiB / TensorCore) or unknown: stay conservative.
    return 28 * 1024 * 1024, 40 * 1024 * 1024


# ----------------------- Pallas fused grouped GEMM + bias -----------------------

def _grouped_gemm_bias_kernel(cols_ref, w_ref, b_ref, o_ref, acc_ref):
    k = pl.program_id(3)

    @pl.when(k == 0)
    def _():
        # initialize the accumulator with the broadcast bias -> no epilogue add
        acc_ref[...] = jnp.broadcast_to(b_ref[...], acc_ref.shape)

    acc_ref[...] += jnp.dot(cols_ref[...], w_ref[...],
                            preferred_element_type=jnp.float32)

    @pl.when(k == pl.num_programs(3) - 1)
    def _():
        o_ref[...] = acc_ref[...].astype(o_ref.dtype)


def _grouped_gemm_bias(cols, weight, bias, compute_dtype=jnp.bfloat16,
                       out_dtype=jnp.float32, tm_cap=2048, tk_cap=512, tn_cap=1024):
    """cols: (M, G, Kg) with per-group K layout (p, c);  weight: (Cout, Cin_g, P);
    bias: (Cout,).  Returns (M, Cout) in out_dtype."""
    M, G, Kg = cols.shape
    Cout, Cin_g, P = weight.shape
    Cout_g = Cout // G
    assert Kg == Cin_g * P

    in_isz = jnp.dtype(compute_dtype).itemsize
    out_isz = jnp.dtype(out_dtype).itemsize
    budget, vmem_limit = _vmem_config()

    # ---- tile derivation: lane-dense K/N, whole-group Cout tile (nb==1) when it fits ----
    Kg128 = _round_up(Kg, 128)
    Npg128 = _round_up(Cout_g, 128)

    tn = Npg128 if Npg128 <= tn_cap else _choose_tile(Npg128, tn_cap)
    tk = _choose_tile(Kg128, tk_cap)
    tm = min(tm_cap, _round_up(M, 16))

    def _bytes(tm_, tk_, tn_):
        # double-buffered cols/weight/output blocks + f32 accumulator + bias
        return (2 * tm_ * tk_ * in_isz + 2 * tk_ * tn_ * in_isz
                + 2 * tm_ * tn_ * out_isz + tm_ * tn_ * 4 + 2 * tn_ * 4)

    while _bytes(tm, tk, tn) > budget and tm > 256:
        tm = max(256, _round_up(tm // 2, 16))
    while _bytes(tm, tk, tn) > budget and tn > 128:
        tn = _choose_tile(Npg128, max(128, tn // 2))
    while _bytes(tm, tk, tn) > budget and tk > 128:
        tk = _choose_tile(Kg128, max(128, tk // 2))

    nm = pl.cdiv(M, tm)
    tm = min(tm, _round_up(pl.cdiv(M, nm), 16))   # rebalance M tiles to shrink padding
    Mp = nm * tm
    Kgp = _round_up(Kg128, tk)
    kb = Kgp // tk
    Npgp = _round_up(Npg128, tn)
    nb = Npgp // tn

    # cols -> bf16 (usually already bf16 from the gather); pad only when actually needed.
    # K pad must be zeros so the ragged tail never feeds garbage into the accumulator.
    cols = cols.astype(compute_dtype)
    if Mp != M or Kgp != Kg:
        cols = jnp.pad(cols, ((0, Mp - M), (0, 0), (0, Kgp - Kg)))
    cols_p = cols.reshape(Mp, G * Kgp)

    # weight -> (G, Kgp, Npgp) with K layout (p, c) matching cols
    w = jnp.transpose(weight, (0, 2, 1)).reshape(G, Cout_g, Kg)      # (G, Cout_g, Kg)
    w = jnp.transpose(w, (0, 2, 1))                                  # (G, Kg, Cout_g)
    w = jnp.pad(w, ((0, 0), (0, Kgp - Kg), (0, Npgp - Cout_g))).astype(compute_dtype)

    b = jnp.pad(bias.astype(jnp.float32).reshape(G, 1, Cout_g),
                ((0, 0), (0, 0), (0, Npgp - Cout_g)))

    grid = (G, Mp // tm, nb, kb)

    cost = pl.CostEstimate(
        flops=2 * G * Mp * Kgp * Npgp,
        transcendentals=0,
        bytes_accessed=int(Mp) * G * Kgp * in_isz * nb            # cols re-read per Cout tile
        + G * Kgp * Npgp * in_isz * (Mp // tm)                    # weight re-read per M tile
        + G * Npgp * 4 * (Mp // tm)
        + int(Mp) * G * Npgp * out_isz,
    )

    out = pl.pallas_call(
        _grouped_gemm_bias_kernel,
        out_shape=jax.ShapeDtypeStruct((Mp, G * Npgp), out_dtype),
        grid_spec=pltpu.PrefetchScalarGridSpec(
            num_scalar_prefetch=0,
            grid=grid,
            in_specs=[
                # cols: K axis is laid out per group (G contiguous slabs of Kgp)
                pl.BlockSpec((tm, tk), lambda g, i, j, k: (i, g * kb + k)),
                # weight slab for group g
                pl.BlockSpec((None, tk, tn), lambda g, i, j, k: (g, k, j)),
                # bias follows the Cout tile index
                pl.BlockSpec((None, 1, tn), lambda g, i, j, k: (g, 0, j)),
            ],
            out_specs=pl.BlockSpec((tm, tn), lambda g, i, j, k: (i, g * nb + j)),
            scratch_shapes=[pltpu.VMEM((tm, tn), jnp.float32)],
        ),
        compiler_params=pltpu.CompilerParams(
            dimension_semantics=("parallel", "parallel", "parallel", "arbitrary"),
            vmem_limit_bytes=vmem_limit,
        ),
        cost_estimate=cost,
    )(cols_p, w, b)

    out = out[:M].reshape(M, G, Npgp)[:, :, :Cout_g].reshape(M, Cout)
    return out


# ------------------------- deformable trilinear im2col -------------------------
# TODO(synk): the data-dependent trilinear gather (and the offset-generating Conv3d) have no
# clean Pallas TPU equivalent (irregular gather); they run in plain JAX and feed the Pallas GEMM.

def _trilinear_gather(x_cl, z, y, xw):
    """x_cl: (N, D, H, W, Cg) channels-last (may be bf16); z, y, xw: (N, Do, Ho, Wo, P) f32
    coords.  Returns (N, Do, Ho, Wo, P, Cg) in x_cl.dtype -- GEMM-ready layout, zero outside
    boundaries.  Interpolation math is done in f32; only values/result use x_cl.dtype."""
    N, D, H, W, Cg = x_cl.shape
    flat = x_cl.reshape(N, D * H * W, Cg)

    z0 = jnp.floor(z)
    y0 = jnp.floor(y)
    x0 = jnp.floor(xw)
    lz, ly, lx = z - z0, y - y0, xw - x0
    z0i = z0.astype(jnp.int32)
    y0i = y0.astype(jnp.int32)
    x0i = x0.astype(jnp.int32)

    def corner(zi, yi, xi, wz, wy, wx):
        valid = ((zi >= 0) & (zi < D) & (yi >= 0) & (yi < H) & (xi >= 0) & (xi < W))
        zc = jnp.clip(zi, 0, D - 1)
        yc = jnp.clip(yi, 0, H - 1)
        xc = jnp.clip(xi, 0, W - 1)
        idx = (zc * H + yc) * W + xc                       # (N, Do, Ho, Wo, P)
        g = jax.vmap(lambda a, i: a[i.reshape(-1)])(flat, idx)   # (N, Do*Ho*Wo*P, Cg)
        g = g.reshape(idx.shape + (Cg,)).astype(jnp.float32)
        wgt = (wz * wy * wx) * valid.astype(jnp.float32)
        return g * wgt[..., None]

    out = jnp.zeros(z.shape + (Cg,), dtype=jnp.float32)
    for zi, wz in ((z0i, 1.0 - lz), (z0i + 1, lz)):
        for yi, wy in ((y0i, 1.0 - ly), (y0i + 1, ly)):
            for xi, wx in ((x0i, 1.0 - lx), (x0i + 1, lx)):
                out = out + corner(zi, yi, xi, wz, wy, wx)
    return out.astype(x_cl.dtype)


# ------------------------------- forward wrappers -------------------------------

def sparse_conv3d(x, offset, weight, bias, kernel_size, stride, padding,
                  dilation=1, groups=1, deformable_groups=1, compute_dtype=jnp.bfloat16):
    ks, st, pad, dil = _triple(kernel_size), _triple(stride), _triple(padding), _triple(dilation)
    N, Cin, D, H, W = x.shape
    Cout, Cin_g, P = weight.shape
    assert Cin_g * groups == Cin
    assert P == ks[0] * ks[1] * ks[2]

    Do = (D + 2 * pad[0] - dil[0] * (ks[0] - 1) - 1) // st[0] + 1
    Ho = (H + 2 * pad[1] - dil[1] * (ks[1] - 1) - 1) // st[1] + 1
    Wo = (W + 2 * pad[2] - dil[2] * (ks[2] - 1) - 1) // st[2] + 1
    assert offset.shape == (N, 3 * deformable_groups * P, Do, Ho, Wo), \
        "offset channel num incorrect"

    # channels-last input in compute_dtype (cheap, input-sized transpose; the 27x-inflated
    # im2col tensor is then produced directly in bf16 and never transposed afterwards)
    x_cl = jnp.transpose(x, (0, 2, 3, 4, 1)).astype(compute_dtype)

    # base (regular conv) sampling grid, broadcast shape (1, Do, Ho, Wo, P)
    kd, kh, kw = jnp.meshgrid(jnp.arange(ks[0]), jnp.arange(ks[1]), jnp.arange(ks[2]),
                              indexing='ij')
    kd, kh, kw = kd.reshape(-1), kh.reshape(-1), kw.reshape(-1)          # (P,)
    od = (jnp.arange(Do) * st[0] - pad[0]).astype(jnp.float32)
    oh = (jnp.arange(Ho) * st[1] - pad[1]).astype(jnp.float32)
    ow = (jnp.arange(Wo) * st[2] - pad[2]).astype(jnp.float32)
    base_z = od[None, :, None, None, None] + (kd * dil[0]).astype(jnp.float32)[None, None, None, None, :]
    base_y = oh[None, None, :, None, None] + (kh * dil[1]).astype(jnp.float32)[None, None, None, None, :]
    base_x = ow[None, None, None, :, None] + (kw * dil[2]).astype(jnp.float32)[None, None, None, None, :]

    # offset channel layout (dgroup, dim, point) per the Pack module's dim_mask convention
    off = offset.reshape(N, deformable_groups, 3, P, Do, Ho, Wo).astype(jnp.float32)
    Cdg = Cin // deformable_groups

    vals = []
    for dg in range(deformable_groups):
        off_g = jnp.moveaxis(off[:, dg], 2, -1)          # (N, 3, Do, Ho, Wo, P)
        z = base_z + off_g[:, 0]
        y = base_y + off_g[:, 1]
        xw = base_x + off_g[:, 2]
        vals.append(_trilinear_gather(x_cl[..., dg * Cdg:(dg + 1) * Cdg], z, y, xw))
    vals = vals[0] if deformable_groups == 1 else jnp.concatenate(vals, axis=-1)
    # vals: (N, Do, Ho, Wo, P, Cin) in bf16 -- already GEMM-ready, no post-gather transpose

    M = N * Do * Ho * Wo
    Kg = Cin_g * P
    if groups == 1:
        cols = vals.reshape(M, 1, Kg)
    else:
        # TODO(synk): this transpose re-materializes the 27x tensor for groups>1; a 4-D
        # (M, P, G, Cin_g) cols BlockSpec would avoid it but needs Cin_g % 128 == 0 for
        # lane-dense kernel tiles.
        cols = jnp.transpose(vals.reshape(M, P, groups, Cin_g), (0, 2, 1, 3)).reshape(M, groups, Kg)

    out2d = _grouped_gemm_bias(cols, weight, bias, compute_dtype=compute_dtype,
                               out_dtype=x.dtype)                      # (M, Cout) in x.dtype
    out = out2d.reshape(N, Do, Ho, Wo, Cout)
    return jnp.transpose(out, (0, 4, 1, 2, 3))


def sparse_conv3d_pack_forward(x, params, kernel_size, stride, padding,
                               dilation=1, groups=1, deformable_groups=1):
    """SparseConv3dPack.forward: offset = dim_mask * Conv3d(x); then deformable conv."""
    ks, st, pad = _triple(kernel_size), _triple(stride), _triple(padding)
    off_w, off_b, dim_mask, weight, bias = (
        params["offset_w"], params["offset_b"], params["dim_mask"],
        params["weight"], params["bias"])

    offset = lax.conv_general_dilated(
        x, off_w, window_strides=st,
        padding=[(pad[0], pad[0]), (pad[1], pad[1]), (pad[2], pad[2])],
        dimension_numbers=("NCDHW", "OIDHW", "NCDHW"))
    offset = offset + off_b.reshape(1, -1, 1, 1, 1)
    offset = offset * dim_mask.reshape(1, -1, 1, 1, 1)

    return sparse_conv3d(x, offset, weight, bias, kernel_size, stride, padding,
                         dilation=dilation, groups=groups,
                         deformable_groups=deformable_groups)


# -------------------------- deterministic parameter init --------------------------

def init_sparse_conv3d_params(key, in_channels, out_channels, num_pts, groups=1,
                              use_bias=True, dtype=jnp.float32):
    """Matches torch kaiming_uniform_(a=sqrt(5)) + uniform bias bound 1/sqrt(fan_in)."""
    cin_g = in_channels // groups
    fan_in = cin_g * num_pts
    kw_bound = math.sqrt(1.0 / fan_in)
    kb, kw_ = jax.random.split(key)
    weight = jax.random.uniform(kw_, (out_channels, cin_g, num_pts),
                                minval=-kw_bound, maxval=kw_bound, dtype=dtype)
    if use_bias:
        b_bound = 1.0 / math.sqrt(fan_in)
        bias = jax.random.uniform(kb, (out_channels,), minval=-b_bound, maxval=b_bound,
                                  dtype=dtype)
    else:
        bias = jnp.zeros((out_channels,), dtype=dtype)
    return weight, bias


def init_sparse_conv3d_pack_params(key, in_channels, out_channels, kernel_size,
                                   groups=1, deformable_groups=1, use_bias=True,
                                   dim_mask=(1, 1, 1), dtype=jnp.float32):
    ks = _triple(kernel_size)
    P = ks[0] * ks[1] * ks[2]
    k_main, k_offb = jax.random.split(key)
    weight, bias = init_sparse_conv3d_params(k_main, in_channels, out_channels, P,
                                             groups=groups, use_bias=use_bias, dtype=dtype)
    off_out = deformable_groups * 3 * P
    # conv_offset: zero weights, uniform bias in [-bound, bound] with bound = sum(ks)//6
    off_w = jnp.zeros((off_out, in_channels, ks[0], ks[1], ks[2]), dtype=dtype)
    bound = float((ks[0] + ks[1] + ks[2]) // 6)
    off_b = jax.random.uniform(k_offb, (off_out,), minval=-bound, maxval=bound, dtype=dtype)
    dm = jnp.tile(jnp.repeat(jnp.asarray(dim_mask, dtype=dtype), P), deformable_groups)
    return {"weight": weight, "bias": bias, "offset_w": off_w, "offset_b": off_b,
            "dim_mask": dm}


# ------------------------------------- main -------------------------------------

if __name__ == "__main__":
    key = jax.random.PRNGKey(0)
    k_x, k_off, k_par = jax.random.split(key, 3)

    N, Cin, Cout = 2, 4, 8
    D = H = W = 8
    ks, stride, padding = 3, 1, 1
    groups, dgroups = 1, 1
    P = ks * ks * ks                    # num_pts = 27

    x = jax.random.normal(k_x, (N, Cin, D, H, W), dtype=jnp.float32)
    params = init_sparse_conv3d_pack_params(k_par, Cin, Cout, ks,
                                            groups=groups, deformable_groups=dgroups)

    # 1) full SparseConv3dPack forward (offset produced by the internal Conv3d + dim_mask)
    pack_fwd = jax.jit(functools.partial(sparse_conv3d_pack_forward,
                                         kernel_size=ks, stride=stride, padding=padding,
                                         dilation=1, groups=groups,
                                         deformable_groups=dgroups))
    out = jax.block_until_ready(pack_fwd(x, params))
    assert out.shape == (N, Cout, D, H, W), out.shape
    assert jnp.all(jnp.isfinite(out))

    # 2) core SparseConv3d with a non-trivial external offset (exercises the gather fully)
    offset = 0.5 * jax.random.normal(k_off, (N, 3 * dgroups * P, D, H, W), dtype=jnp.float32)
    core_fwd = jax.jit(functools.partial(sparse_conv3d,
                                         kernel_size=ks, stride=stride, padding=padding,
                                         dilation=1, groups=groups,
                                         deformable_groups=dgroups))
    out2 = jax.block_until_ready(core_fwd(x, offset, params["weight"], params["bias"]))
    assert out2.shape == (N, Cout, D, H, W), out2.shape
    assert jnp.all(jnp.isfinite(out2))

    print("KERNEL_OK")
</pallas_src>

<mosaic_0001>
module attributes {stable_mosaic.version = 11 : i64} {
  func.func @_grouped_gemm_bias_kernel(%arg0: i32, %arg1: i32, %arg2: i32, %arg3: i32, %arg4: memref<1024x128xbf16, #tpu.memory_space<vmem>>, %arg5: memref<1x128x128xbf16, #tpu.memory_space<vmem>>, %arg6: memref<1x1x128xf32, #tpu.memory_space<vmem>>, %arg7: memref<1024x128xf32, #tpu.memory_space<vmem>>, %arg8: memref<1024x128xf32, #tpu.memory_space<vmem>>) attributes {dimension_semantics = [#tpu.dimension_semantics<parallel>, #tpu.dimension_semantics<parallel>, #tpu.dimension_semantics<parallel>, #tpu.dimension_semantics<arbitrary>], iteration_bounds = array<i64: 1, 1, 1, 1>, scalar_prefetch = 0 : i64, scratch_operands = 1 : i64, tpu.core_type = #tpu.core_type<tc>, window_params = [{transform_indices = @transform_0, window_bounds = array<i64: 1024, 128>}, {transform_indices = @transform_1, window_bounds = array<i64: 1, 128, 128>}, {transform_indices = @transform_2, window_bounds = array<i64: 1, 1, 128>}, {transform_indices = @transform_3, window_bounds = array<i64: 1024, 128>}]} {
    %c0_i32 = arith.constant 0 : i32
    %0 = arith.cmpi eq, %arg3, %c0_i32 : i32
    %1 = arith.extui %0 : i1 to i32
    %c0_i32_0 = arith.constant 0 : i32
    %2 = arith.cmpi ne, %1, %c0_i32_0 : i32
    scf.if %2 {
      %c0_11 = arith.constant 0 : index
      %c0_12 = arith.constant 0 : index
      %c0_13 = arith.constant 0 : index
      %13 = vector.load %arg6[%c0_11, %c0_12, %c0_13] : memref<1x1x128xf32, #tpu.memory_space<vmem>>, vector<1x1x128xf32>
      %14 = vector.shape_cast %13 : vector<1x1x128xf32> to vector<1x128xf32>
      %15 = vector.shape_cast %14 : vector<1x128xf32> to vector<1x128xf32>
      %16 = vector.broadcast %15 : vector<1x128xf32> to vector<1024x128xf32>
      %c0_14 = arith.constant 0 : index
      %c0_15 = arith.constant 0 : index
      %17 = vector.load %arg8[%c0_14, %c0_15] : memref<1024x128xf32, #tpu.memory_space<vmem>>, vector<1024x128xf32>
      tpu.vector_store %arg8[%c0_14, %c0_15], %16 {strides = array<i32>} : memref<1024x128xf32, #tpu.memory_space<vmem>>, vector<1024x128xf32>,
    } else {
    }
    %c0 = arith.constant 0 : index
    %c0_1 = arith.constant 0 : index
    %3 = vector.load %arg8[%c0, %c0_1] : memref<1024x128xf32, #tpu.memory_space<vmem>>, vector<1024x128xf32>
    %c0_2 = arith.constant 0 : index
    %c0_3 = arith.constant 0 : index
    %4 = vector.load %arg4[%c0_2, %c0_3] : memref<1024x128xbf16, #tpu.memory_space<vmem>>, vector<1024x128xbf16>
    %c0_4 = arith.constant 0 : index
    %c0_5 = arith.constant 0 : index
    %c0_6 = arith.constant 0 : index
    %5 = vector.load %arg5[%c0_4, %c0_5, %c0_6] : memref<1x128x128xbf16, #tpu.memory_space<vmem>>, vector<1x128x128xbf16>
    %6 = vector.shape_cast %5 : vector<1x128x128xbf16> to vector<128x128xbf16>
    %cst = arith.constant dense<0.000000e+00> : vector<1024x128xf32>
    %7 = tpu.matmul %4, %6, %cst {dimension_numbers = #tpu.dot_dimension_numbers<[1], [0], [0], [1], [0, 0, 1, 1], [], []>} : vector<1024x128xbf16>, vector<128x128xbf16>, vector<1024x128xf32> -> vector<1024x128xf32>
    %8 = arith.addf %3, %7 : vector<1024x128xf32>
    %c0_7 = arith.constant 0 : index
    %c0_8 = arith.constant 0 : index
    %9 = vector.load %arg8[%c0_7, %c0_8] : memref<1024x128xf32, #tpu.memory_space<vmem>>, vector<1024x128xf32>
    tpu.vector_store %arg8[%c0_7, %c0_8], %8 {strides = array<i32>} : memref<1024x128xf32, #tpu.memory_space<vmem>>, vector<1024x128xf32>,
    %c0_i32_9 = arith.constant 0 : i32
    %10 = arith.cmpi eq, %arg3, %c0_i32_9 : i32
    %11 = arith.extui %10 : i1 to i32
    %c0_i32_10 = arith.constant 0 : i32
    %12 = arith.cmpi ne, %11, %c0_i32_10 : i32
    scf.if %12 {
      %c0_11 = arith.constant 0 : index
      %c0_12 = arith.constant 0 : index
      %13 = vector.load %arg8[%c0_11, %c0_12] : memref<1024x128xf32, #tpu.memory_space<vmem>>, vector<1024x128xf32>
      %c0_13 = arith.constant 0 : index
      %c0_14 = arith.constant 0 : index
      %14 = vector.load %arg7[%c0_13, %c0_14] : memref<1024x128xf32, #tpu.memory_space<vmem>>, vector<1024x128xf32>
      tpu.vector_store %arg7[%c0_13, %c0_14], %13 {strides = array<i32>} : memref<1024x128xf32, #tpu.memory_space<vmem>>, vector<1024x128xf32>,
    } else {
    }
    return
  }
  func.func @transform_0(%arg0: i32, %arg1: i32, %arg2: i32, %arg3: i32) -> (i32, i32) {
    %c1_i32 = arith.constant 1 : i32
    %0 = arith.muli %arg0, %c1_i32 : i32
    %1 = arith.addi %0, %arg3 : i32
    %c0_i32 = arith.constant 0 : i32
    return %arg1, %1 : i32, i32
  }
  func.func @transform_1(%arg0: i32, %arg1: i32, %arg2: i32, %arg3: i32) -> (i32, i32, i32) {
    %c0_i32 = arith.constant 0 : i32
    return %arg0, %arg3, %arg2 : i32, i32, i32
  }
  func.func @transform_2(%arg0: i32, %arg1: i32, %arg2: i32, %arg3: i32) -> (i32, i32, i32) {
    %c0_i32 = arith.constant 0 : i32
    %c0_i32_0 = arith.constant 0 : i32
    return %arg0, %c0_i32, %arg2 : i32, i32, i32
  }
  func.func @transform_3(%arg0: i32, %arg1: i32, %arg2: i32, %arg3: i32) -> (i32, i32) {
    %c1_i32 = arith.constant 1 : i32
    %0 = arith.muli %arg0, %c1_i32 : i32
    %1 = arith.addi %0, %arg2 : i32
    %c0_i32 = arith.constant 0 : i32
    return %arg1, %1 : i32, i32
  }
}

</mosaic_0001>

<llo_original>
// kernel: sparse_conv3d_pack_forward.1
$region0: #{sparse_conv3d_pack_forward.1}
  #allocation0 [shape = 'u32[]', space=smem, size = 0x4, offset = 0x4, fixed_abs, tag = 'smem constant byte address 0x4 - core index']
  #allocation1 [shape = 'u32[144,128]{1,0:T(1,128)}', space=vmem, size = 0x12000, scoped, tag = 'internal scratch']
  #allocation2 [shape = 'f32[1024,128]{1,0:T(8,128)}', space=vmem, size = 0x80000, scoped, tag = 'scratch operand']
  %s0 = inlined_call_operand.vmem [shape: bf16[1024,128], index: 0, kind: input, shape index: {}]
  %s1 = inlined_call_operand.vmem [shape: bf16[1,128,128], index: 1, kind: input, shape index: {}]
  %s2 = inlined_call_operand.vmem [shape: f32[1,1,128], index: 2, kind: input, shape index: {}]
  %s3 = inlined_call_operand.vmem [shape: f32[1024,128], index: 3, kind: output, shape index: {}]
  %s4 = sld [smem:[#allocation0]]
  $region30: #{sparse_conv3d_pack_forward.1} parent=0
    _
  %s6 = ssub.s32 1, %s4
  %s7 = scalar_select 0, %s6, %s4
  // Predicated region
  $region2: #{sparse_conv3d_pack_forward.1} parent=0 // pred_check
    _
  $region3: #{sparse_conv3d_pack_forward.1} parent=0 // pred_check_branch
    %9 = sbr.rel (0) target = $region5
  $region4: #{sparse_conv3d_pack_forward.1} parent=0 // pred_region
    %s10 = sadd.s32 0, 0
    %p11 = scmp.lt.s32.totalorder %s10, 0
    %s12 = scalar_select %p11, %s10, 0
    %s13 = smul.addr %s12, 4
    %s14 = scalar_lea.vmem %s0, %s13
    %s15 = sadd.s32 0, 0
  $region5: #{sparse_conv3d_pack_forward.1} parent=0 // pred_fallthru
    _
  // Predicated region
  $region6: #{sparse_conv3d_pack_forward.1} parent=0 // pred_check
    _
  $region7: #{sparse_conv3d_pack_forward.1} parent=0 // pred_check_branch
    %17 = sbr.rel (0) target = $region9
  $region8: #{sparse_conv3d_pack_forward.1} parent=0 // pred_region
    _
  $region9: #{sparse_conv3d_pack_forward.1} parent=0 // pred_fallthru
    _
  // Predicated region
  $region10: #{sparse_conv3d_pack_forward.1} parent=0 // pred_check
    _
  $region11: #{sparse_conv3d_pack_forward.1} parent=0 // pred_check_branch
    %19 = sbr.rel (0) target = $region13
  $region12: #{sparse_conv3d_pack_forward.1} parent=0 // pred_region
    _
  $region13: #{sparse_conv3d_pack_forward.1} parent=0 // pred_fallthru
    _
  %s20 = sadd.s32 0, 0
  %p21 = scmp.lt.s32.totalorder %s20, 0
  %s22 = scalar_select %p21, %s20, 0
  %s23 = smul.addr %s22, 4
  %s24 = scalar_lea.vmem %s0, %s23
  %s25 = sadd.s32 0, 0
  %p26 = scmp.lt.s32.totalorder %s25, 0
  %s27 = scalar_select %p26, %s25, 0
  %s28 = smul.addr %s27, 8
  %s29 = scalar_lea.vmem %s3, %s28
  %s30 = sadd.s32 0, 0
  %p31 = scmp.lt.s32.totalorder %s30, 0
  %s32 = scalar_select %p31, %s30, 0
  %s33 = smul.addr %s32, 4
  %s34 = scalar_lea.vmem %s0, %s33
  %s35 = sadd.s32 0, 0
  %s36 = sadd.s32 0, 0
  %p37 = scmp.lt.s32.totalorder %s36, 0
  %s38 = scalar_select %p37, %s36, 0
  %s39 = smul.addr %s38, 8
  %s40 = scalar_lea.vmem %s3, %s39
  %s41 = sadd.s32 0, 0
  %p43 = scmp.eq.s32.totalorder 0, 0
  // Predicated region
  $region14: #{sparse_conv3d_pack_forward.1} parent=0 // pred_check
    %p44 = pneg %p43
  $region15: #{sparse_conv3d_pack_forward.1} parent=0 // pred_check_branch
    %46 = sbr.rel (%p44) target = $region17
  $region16: #{sparse_conv3d_pack_forward.1} parent=0 // pred_region
    %v47 = vld [vmem:[%s2] sm:$0x1]
    %v49 = vlaneseq
    %v50 = vshrl.u32 %v49, 7
    %v51 = vsub.s32 0, %v50
    %v52 = vrot.slane %v47, %v51
    %54 = vst [vmem:[#allocation2] sm:$0xff] %v52
    %55 = vst [vmem:[#allocation2 + $0x8] sm:$0xff] %v52
    %56 = vst [vmem:[#allocation2 + $0x10] sm:$0xff] %v52
    %57 = vst [vmem:[#allocation2 + $0x18] sm:$0xff] %v52
    %58 = vst [vmem:[#allocation2 + $0x20] sm:$0xff] %v52
    %59 = vst [vmem:[#allocation2 + $0x28] sm:$0xff] %v52
    %60 = vst [vmem:[#allocation2 + $0x30] sm:$0xff] %v52
    %61 = vst [vmem:[#allocation2 + $0x38] sm:$0xff] %v52
    %62 = vst [vmem:[#allocation2 + $0x40] sm:$0xff] %v52
    %63 = vst [vmem:[#allocation2 + $0x48] sm:$0xff] %v52
    %64 = vst [vmem:[#allocation2 + $0x50] sm:$0xff] %v52
    %65 = vst [vmem:[#allocation2 + $0x58] sm:$0xff] %v52
    %66 = vst [vmem:[#allocation2 + $0x60] sm:$0xff] %v52
    %67 = vst [vmem:[#allocation2 + $0x68] sm:$0xff] %v52
    %68 = vst [vmem:[#allocation2 + $0x70] sm:$0xff] %v52
    %69 = vst [vmem:[#allocation2 + $0x78] sm:$0xff] %v52
    %70 = vst [vmem:[#allocation2 + $0x80] sm:$0xff] %v52
    %71 = vst [vmem:[#allocation2 + $0x88] sm:$0xff] %v52
    %72 = vst [vmem:[#allocation2 + $0x90] sm:$0xff] %v52
    %73 = vst [vmem:[#allocation2 + $0x98] sm:$0xff] %v52
    %74 = vst [vmem:[#allocation2 + $0xa0] sm:$0xff] %v52
    %75 = vst [vmem:[#allocation2 + $0xa8] sm:$0xff] %v52
    %76 = vst [vmem:[#allocation2 + $0xb0] sm:$0xff] %v52
    %77 = vst [vmem:[#allocation2 + $0xb8] sm:$0xff] %v52
    %78 = vst [vmem:[#allocation2 + $0xc0] sm:$0xff] %v52
    %79 = vst [vmem:[#allocation2 + $0xc8] sm:$0xff] %v52
    %80 = vst [vmem:[#allocation2 + $0xd0] sm:$0xff] %v52
    %81 = vst [vmem:[#allocation2 + $0xd8] sm:$0xff] %v52
    %82 = vst [vmem:[#allocation2 + $0xe0] sm:$0xff] %v52
    %83 = vst [vmem:[#allocation2 + $0xe8] sm:$0xff] %v52
    %84 = vst [vmem:[#allocation2 + $0xf0] sm:$0xff] %v52
    %85 = vst [vmem:[#allocation2 + $0xf8] sm:$0xff] %v52
    %86 = vst [vmem:[#allocation2 + $0x100] sm:$0xff] %v52
    %87 = vst [vmem:[#allocation2 + $0x108] sm:$0xff] %v52
    %88 = vst [vmem:[#allocation2 + $0x110] sm:$0xff] %v52
    %89 = vst [vmem:[#allocation2 + $0x118] sm:$0xff] %v52
    %90 = vst [vmem:[#allocation2 + $0x120] sm:$0xff] %v52
    %91 = vst [vmem:[#allocation2 + $0x128] sm:$0xff] %v52
    %92 = vst [vmem:[#allocation2 + $0x130] sm:$0xff] %v52
    %93 = vst [vmem:[#allocation2 + $0x138] sm:$0xff] %v52
    %94 = vst [vmem:[#allocation2 + $0x140] sm:$0xff] %v52
    %95 = vst [vmem:[#allocation2 + $0x148] sm:$0xff] %v52
    %96 = vst [vmem:[#allocation2 + $0x150] sm:$0xff] %v52
    %97 = vst [vmem:[#allocation2 + $0x158] sm:$0xff] %v52
    %98 = vst [vmem:[#allocation2 + $0x160] sm:$0xff] %v52
    %99 = vst [vmem:[#allocation2 + $0x168] sm:$0xff] %v52
    %100 = vst [vmem:[#allocation2 + $0x170] sm:$0xff] %v52
    %101 = vst [vmem:[#allocation2 + $0x178] sm:$0xff] %v52
    %102 = vst [vmem:[#allocation2 + $0x180] sm:$0xff] %v52
    %103 = vst [vmem:[#allocation2 + $0x188] sm:$0xff] %v52
    %104 = vst [vmem:[#allocation2 + $0x190] sm:$0xff] %v52
    %105 = vst [vmem:[#allocation2 + $0x198] sm:$0xff] %v52
    %106 = vst [vmem:[#allocation2 + $0x1a0] sm:$0xff] %v52
    %107 = vst [vmem:[#allocation2 + $0x1a8] sm:$0xff] %v52
    %108 = vst [vmem:[#allocation2 + $0x1b0] sm:$0xff] %v52
    %109 = vst [vmem:[#allocation2 + $0x1b8] sm:$0xff] %v52
    %110 = vst [vmem:[#allocation2 + $0x1c0] sm:$0xff] %v52
    %111 = vst [vmem:[#allocation2 + $0x1c8] sm:$0xff] %v52
    %112 = vst [vmem:[#allocation2 + $0x1d0] sm:$0xff] %v52
    %113 = vst [vmem:[#allocation2 + $0x1d8] sm:$0xff] %v52
    %114 = vst [vmem:[#allocation2 + $0x1e0] sm:$0xff] %v52
    %115 = vst [vmem:[#allocation2 + $0x1e8] sm:$0xff] %v52
    %116 = vst [vmem:[#allocation2 + $0x1f0] sm:$0xff] %v52
    %117 = vst [vmem:[#allocation2 + $0x1f8] sm:$0xff] %v52
    %118 = vst [vmem:[#allocation2 + $0x200] sm:$0xff] %v52
    %119 = vst [vmem:[#allocation2 + $0x208] sm:$0xff] %v52
    %120 = vst [vmem:[#allocation2 + $0x210] sm:$0xff] %v52
    %121 = vst [vmem:[#allocation2 + $0x218] sm:$0xff] %v52
    %122 = vst [vmem:[#allocation2 + $0x220] sm:$0xff] %v52
    %123 = vst [vmem:[#allocation2 + $0x228] sm:$0xff] %v52
    %124 = vst [vmem:[#allocation2 + $0x230] sm:$0xff] %v52
    %125 = vst [vmem:[#allocation2 + $0x238] sm:$0xff] %v52
    %126 = vst [vmem:[#allocation2 + $0x240] sm:$0xff] %v52
    %127 = vst [vmem:[#allocation2 + $0x248] sm:$0xff] %v52
    %128 = vst [vmem:[#allocation2 + $0x250] sm:$0xff] %v52
    %129 = vst [vmem:[#allocation2 + $0x258] sm:$0xff] %v52
    %130 = vst [vmem:[#allocation2 + $0x260] sm:$0xff] %v52
    %131 = vst [vmem:[#allocation2 + $0x268] sm:$0xff] %v52
    %132 = vst [vmem:[#allocation2 + $0x270] sm:$0xff] %v52
    %133 = vst [vmem:[#allocation2 + $0x278] sm:$0xff] %v52
    %134 = vst [vmem:[#allocation2 + $0x280] sm:$0xff] %v52
    %135 = vst [vmem:[#allocation2 + $0x288] sm:$0xff] %v52
    %136 = vst [vmem:[#allocation2 + $0x290] sm:$0xff] %v52
    %137 = vst [vmem:[#allocation2 + $0x298] sm:$0xff] %v52
    %138 = vst [vmem:[#allocation2 + $0x2a0] sm:$0xff] %v52
    %139 = vst [vmem:[#allocation2 + $0x2a8] sm:$0xff] %v52
    %140 = vst [vmem:[#allocation2 + $0x2b0] sm:$0xff] %v52
    %141 = vst [vmem:[#allocation2 + $0x2b8] sm:$0xff] %v52
    %142 = vst [vmem:[#allocation2 + $0x2c0] sm:$0xff] %v52
    %143 = vst [vmem:[#allocation2 + $0x2c8] sm:$0xff] %v52
    %144 = vst [vmem:[#allocation2 + $0x2d0] sm:$0xff] %v52
    %145 = vst [vmem:[#allocation2 + $0x2d8] sm:$0xff] %v52
    %146 = vst [vmem:[#allocation2 + $0x2e0] sm:$0xff] %v52
    %147 = vst [vmem:[#allocation2 + $0x2e8] sm:$0xff] %v52
    %148 = vst [vmem:[#allocation2 + $0x2f0] sm:$0xff] %v52
    %149 = vst [vmem:[#allocation2 + $0x2f8] sm:$0xff] %v52
    %150 = vst [vmem:[#allocation2 + $0x300] sm:$0xff] %v52
    %151 = vst [vmem:[#allocation2 + $0x308] sm:$0xff] %v52
    %152 = vst [vmem:[#allocation2 + $0x310] sm:$0xff] %v52
    %153 = vst [vmem:[#allocation2 + $0x318] sm:$0xff] %v52
    %154 = vst [vmem:[#allocation2 + $0x320] sm:$0xff] %v52
    %155 = vst [vmem:[#allocation2 + $0x328] sm:$0xff] %v52
    %156 = vst [vmem:[#allocation2 + $0x330] sm:$0xff] %v52
    %157 = vst [vmem:[#allocation2 + $0x338] sm:$0xff] %v52
    %158 = vst [vmem:[#allocation2 + $0x340] sm:$0xff] %v52
    %159 = vst [vmem:[#allocation2 + $0x348] sm:$0xff] %v52
    %160 = vst [vmem:[#allocation2 + $0x350] sm:$0xff] %v52
    %161 = vst [vmem:[#allocation2 + $0x358] sm:$0xff] %v52
    %162 = vst [vmem:[#allocation2 + $0x360] sm:$0xff] %v52
    %163 = vst [vmem:[#allocation2 + $0x368] sm:$0xff] %v52
    %164 = vst [vmem:[#allocation2 + $0x370] sm:$0xff] %v52
    %165 = vst [vmem:[#allocation2 + $0x378] sm:$0xff] %v52
    %166 = vst [vmem:[#allocation2 + $0x380] sm:$0xff] %v52
    %167 = vst [vmem:[#allocation2 + $0x388] sm:$0xff] %v52
    %168 = vst [vmem:[#allocation2 + $0x390] sm:$0xff] %v52
    %169 = vst [vmem:[#allocation2 + $0x398] sm:$0xff] %v52
    %170 = vst [vmem:[#allocation2 + $0x3a0] sm:$0xff] %v52
    %171 = vst [vmem:[#allocation2 + $0x3a8] sm:$0xff] %v52
    %172 = vst [vmem:[#allocation2 + $0x3b0] sm:$0xff] %v52
    %173 = vst [vmem:[#allocation2 + $0x3b8] sm:$0xff] %v52
    %174 = vst [vmem:[#allocation2 + $0x3c0] sm:$0xff] %v52
    %175 = vst [vmem:[#allocation2 + $0x3c8] sm:$0xff] %v52
    %176 = vst [vmem:[#allocation2 + $0x3d0] sm:$0xff] %v52
    %177 = vst [vmem:[#allocation2 + $0x3d8] sm:$0xff] %v52
    %178 = vst [vmem:[#allocation2 + $0x3e0] sm:$0xff] %v52
    %179 = vst [vmem:[#allocation2 + $0x3e8] sm:$0xff] %v52
    %180 = vst [vmem:[#allocation2 + $0x3f0] sm:$0xff] %v52
    %181 = vst [vmem:[#allocation2 + $0x3f8] sm:$0xff] %v52
  $region17: #{sparse_conv3d_pack_forward.1} parent=0 // pred_fallthru
    _
  %v182 = vld [vmem:[#allocation2] sm:$0xff]
  %v183 = vld [vmem:[#allocation2 + $0x8] sm:$0xff]
  %v184 = vld [vmem:[#allocation2 + $0x10] sm:$0xff]
  %v185 = vld [vmem:[#allocation2 + $0x18] sm:$0xff]
  %v186 = vld [vmem:[#allocation2 + $0x20] sm:$0xff]
  %v187 = vld [vmem:[#allocation2 + $0x28] sm:$0xff]
  %v188 = vld [vmem:[#allocation2 + $0x30] sm:$0xff]
  %v189 = vld [vmem:[#allocation2 + $0x38] sm:$0xff]
  %v190 = vld [vmem:[#allocation2 + $0x40] sm:$0xff]
  %v191 = vld [vmem:[#allocation2 + $0x48] sm:$0xff]
  %v192 = vld [vmem:[#allocation2 + $0x50] sm:$0xff]
  %v193 = vld [vmem:[#allocation2 + $0x58] sm:$0xff]
  %v194 = vld [vmem:[#allocation2 + $0x60] sm:$0xff]
  %v195 = vld [vmem:[#allocation2 + $0x68] sm:$0xff]
  %v196 = vld [vmem:[#allocation2 + $0x70] sm:$0xff]
  %v197 = vld [vmem:[#allocation2 + $0x78] sm:$0xff]
  %v198 = vld [vmem:[#allocation2 + $0x80] sm:$0xff]
  %v199 = vld [vmem:[#allocation2 + $0x88] sm:$0xff]
  %v200 = vld [vmem:[#allocation2 + $0x90] sm:$0xff]
  %v201 = vld [vmem:[#allocation2 + $0x98] sm:$0xff]
  %v202 = vld [vmem:[#allocation2 + $0xa0] sm:$0xff]
  %v203 = vld [vmem:[#allocation2 + $0xa8] sm:$0xff]
  %v204 = vld [vmem:[#allocation2 + $0xb0] sm:$0xff]
  %v205 = vld [vmem:[#allocation2 + $0xb8] sm:$0xff]
  %v206 = vld [vmem:[#allocation2 + $0xc0] sm:$0xff]
  %v207 = vld [vmem:[#allocation2 + $0xc8] sm:$0xff]
  %v208 = vld [vmem:[#allocation2 + $0xd0] sm:$0xff]
  %v209 = vld [vmem:[#allocation2 + $0xd8] sm:$0xff]
  %v210 = vld [vmem:[#allocation2 + $0xe0] sm:$0xff]
  %v211 = vld [vmem:[#allocation2 + $0xe8] sm:$0xff]
  %v212 = vld [vmem:[#allocation2 + $0xf0] sm:$0xff]
  %v213 = vld [vmem:[#allocation2 + $0xf8] sm:$0xff]
  %v214 = vld [vmem:[#allocation2 + $0x100] sm:$0xff]
  %v215 = vld [vmem:[#allocation2 + $0x108] sm:$0xff]
  %v216 = vld [vmem:[#allocation2 + $0x110] sm:$0xff]
  %v217 = vld [vmem:[#allocation2 + $0x118] sm:$0xff]
  %v218 = vld [vmem:[#allocation2 + $0x120] sm:$0xff]
  %v219 = vld [vmem:[#allocation2 + $0x128] sm:$0xff]
  %v220 = vld [vmem:[#allocation2 + $0x130] sm:$0xff]
  %v221 = vld [vmem:[#allocation2 + $0x138] sm:$0xff]
  %v222 = vld [vmem:[#allocation2 + $0x140] sm:$0xff]
  %v223 = vld [vmem:[#allocation2 + $0x148] sm:$0xff]
  %v224 = vld [vmem:[#allocation2 + $0x150] sm:$0xff]
  %v225 = vld [vmem:[#allocation2 + $0x158] sm:$0xff]
  %v226 = vld [vmem:[#allocation2 + $0x160] sm:$0xff]
  %v227 = vld [vmem:[#allocation2 + $0x168] sm:$0xff]
  %v228 = vld [vmem:[#allocation2 + $0x170] sm:$0xff]
  %v229 = vld [vmem:[#allocation2 + $0x178] sm:$0xff]
  %v230 = vld [vmem:[#allocation2 + $0x180] sm:$0xff]
  %v231 = vld [vmem:[#allocation2 + $0x188] sm:$0xff]
  %v232 = vld [vmem:[#allocation2 + $0x190] sm:$0xff]
  %v233 = vld [vmem:[#allocation2 + $0x198] sm:$0xff]
  %v234 = vld [vmem:[#allocation2 + $0x1a0] sm:$0xff]
  %v235 = vld [vmem:[#allocation2 + $0x1a8] sm:$0xff]
  %v236 = vld [vmem:[#allocation2 + $0x1b0] sm:$0xff]
  %v237 = vld [vmem:[#allocation2 + $0x1b8] sm:$0xff]
  %v238 = vld [vmem:[#allocation2 + $0x1c0] sm:$0xff]
  %v239 = vld [vmem:[#allocation2 + $0x1c8] sm:$0xff]
  %v240 = vld [vmem:[#allocation2 + $0x1d0] sm:$0xff]
  %v241 = vld [vmem:[#allocation2 + $0x1d8] sm:$0xff]
  %v242 = vld [vmem:[#allocation2 + $0x1e0] sm:$0xff]
  %v243 = vld [vmem:[#allocation2 + $0x1e8] sm:$0xff]
  %v244 = vld [vmem:[#allocation2 + $0x1f0] sm:$0xff]
  %v245 = vld [vmem:[#allocation2 + $0x1f8] sm:$0xff]
  %v246 = vld [vmem:[#allocation2 + $0x200] sm:$0xff]
  %v247 = vld [vmem:[#allocation2 + $0x208] sm:$0xff]
  %v248 = vld [vmem:[#allocation2 + $0x210] sm:$0xff]
  %v249 = vld [vmem:[#allocation2 + $0x218] sm:$0xff]
  %v250 = vld [vmem:[#allocation2 + $0x220] sm:$0xff]
  %v251 = vld [vmem:[#allocation2 + $0x228] sm:$0xff]
  %v252 = vld [vmem:[#allocation2 + $0x230] sm:$0xff]
  %v253 = vld [vmem:[#allocation2 + $0x238] sm:$0xff]
  %v254 = vld [vmem:[#allocation2 + $0x240] sm:$0xff]
  %v255 = vld [vmem:[#allocation2 + $0x248] sm:$0xff]
  %v256 = vld [vmem:[#allocation2 + $0x250] sm:$0xff]
  %v257 = vld [vmem:[#allocation2 + $0x258] sm:$0xff]
  %v258 = vld [vmem:[#allocation2 + $0x260] sm:$0xff]
  %v259 = vld [vmem:[#allocation2 + $0x268] sm:$0xff]
  %v260 = vld [vmem:[#allocation2 + $0x270] sm:$0xff]
  %v261 = vld [vmem:[#allocation2 + $0x278] sm:$0xff]
  %v262 = vld [vmem:[#allocation2 + $0x280] sm:$0xff]
  %v263 = vld [vmem:[#allocation2 + $0x288] sm:$0xff]
  %v264 = vld [vmem:[#allocation2 + $0x290] sm:$0xff]
  %v265 = vld [vmem:[#allocation2 + $0x298] sm:$0xff]
  %v266 = vld [vmem:[#allocation2 + $0x2a0] sm:$0xff]
  %v267 = vld [vmem:[#allocation2 + $0x2a8] sm:$0xff]
  %v268 = vld [vmem:[#allocation2 + $0x2b0] sm:$0xff]
  %v269 = vld [vmem:[#allocation2 + $0x2b8] sm:$0xff]
  %v270 = vld [vmem:[#allocation2 + $0x2c0] sm:$0xff]
  %v271 = vld [vmem:[#allocation2 + $0x2c8] sm:$0xff]
  %v272 = vld [vmem:[#allocation2 + $0x2d0] sm:$0xff]
  %v273 = vld [vmem:[#allocation2 + $0x2d8] sm:$0xff]
  %v274 = vld [vmem:[#allocation2 + $0x2e0] sm:$0xff]
  %v275 = vld [vmem:[#allocation2 + $0x2e8] sm:$0xff]
  %v276 = vld [vmem:[#allocation2 + $0x2f0] sm:$0xff]
  %v277 = vld [vmem:[#allocation2 + $0x2f8] sm:$0xff]
  %v278 = vld [vmem:[#allocation2 + $0x300] sm:$0xff]
  %v279 = vld [vmem:[#allocation2 + $0x308] sm:$0xff]
  %v280 = vld [vmem:[#allocation2 + $0x310] sm:$0xff]
  %v281 = vld [vmem:[#allocation2 + $0x318] sm:$0xff]
  %v282 = vld [vmem:[#allocation2 + $0x320] sm:$0xff]
  %v283 = vld [vmem:[#allocation2 + $0x328] sm:$0xff]
  %v284 = vld [vmem:[#allocation2 + $0x330] sm:$0xff]
  %v285 = vld [vmem:[#allocation2 + $0x338] sm:$0xff]
  %v286 = vld [vmem:[#allocation2 + $0x340] sm:$0xff]
  %v287 = vld [vmem:[#allocation2 + $0x348] sm:$0xff]
  %v288 = vld [vmem:[#allocation2 + $0x350] sm:$0xff]
  %v289 = vld [vmem:[#allocation2 + $0x358] sm:$0xff]
  %v290 = vld [vmem:[#allocation2 + $0x360] sm:$0xff]
  %v291 = vld [vmem:[#allocation2 + $0x368] sm:$0xff]
  %v292 = vld [vmem:[#allocation2 + $0x370] sm:$0xff]
  %v293 = vld [vmem:[#allocation2 + $0x378] sm:$0xff]
  %v294 = vld [vmem:[#allocation2 + $0x380] sm:$0xff]
  %v295 = vld [vmem:[#allocation2 + $0x388] sm:$0xff]
  %v296 = vld [vmem:[#allocation2 + $0x390] sm:$0xff]
  %v297 = vld [vmem:[#allocation2 + $0x398] sm:$0xff]
  %v298 = vld [vmem:[#allocation2 + $0x3a0] sm:$0xff]
  %v299 = vld [vmem:[#allocation2 + $0x3a8] sm:$0xff]
  %v300 = vld [vmem:[#allocation2 + $0x3b0] sm:$0xff]
  %v301 = vld [vmem:[#allocation2 + $0x3b8] sm:$0xff]
  %v302 = vld [vmem:[#allocation2 + $0x3c0] sm:$0xff]
  %v303 = vld [vmem:[#allocation2 + $0x3c8] sm:$0xff]
  %v304 = vld [vmem:[#allocation2 + $0x3d0] sm:$0xff]
  %v305 = vld [vmem:[#allocation2 + $0x3d8] sm:$0xff]
  %v306 = vld [vmem:[#allocation2 + $0x3e0] sm:$0xff]
  %v307 = vld [vmem:[#allocation2 + $0x3e8] sm:$0xff]
  %v308 = vld [vmem:[#allocation2 + $0x3f0] sm:$0xff]
  %v309 = vld [vmem:[#allocation2 + $0x3f8] sm:$0xff]
  %v310 = vld [vmem:[%s34] sm:$0xf]
  %v311 = vld [vmem:[%s34 + $0x4] sm:$0xf]
  %v312 = vld [vmem:[%s34 + $0x8] sm:$0xf]
  %v313 = vld [vmem:[%s34 + $0xc] sm:$0xf]
  %v314 = vld [vmem:[%s34 + $0x10] sm:$0xf]
  %v315 = vld [vmem:[%s34 + $0x14] sm:$0xf]
  %v316 = vld [vmem:[%s34 + $0x18] sm:$0xf]
  %v317 = vld [vmem:[%s34 + $0x1c] sm:$0xf]
  %v318 = vld [vmem:[%s34 + $0x20] sm:$0xf]
  %v319 = vld [vmem:[%s34 + $0x24] sm:$0xf]
  %v320 = vld [vmem:[%s34 + $0x28] sm:$0xf]
  %v321 = vld [vmem:[%s34 + $0x2c] sm:$0xf]
  %v322 = vld [vmem:[%s34 + $0x30] sm:$0xf]
  %v323 = vld [vmem:[%s34 + $0x34] sm:$0xf]
  %v324 = vld [vmem:[%s34 + $0x38] sm:$0xf]
  %v325 = vld [vmem:[%s34 + $0x3c] sm:$0xf]
  %v326 = vld [vmem:[%s34 + $0x40] sm:$0xf]
  %v327 = vld [vmem:[%s34 + $0x44] sm:$0xf]
  %v328 = vld [vmem:[%s34 + $0x48] sm:$0xf]
  %v329 = vld [vmem:[%s34 + $0x4c] sm:$0xf]
  %v330 = vld [vmem:[%s34 + $0x50] sm:$0xf]
  %v331 = vld [vmem:[%s34 + $0x54] sm:$0xf]
  %v332 = vld [vmem:[%s34 + $0x58] sm:$0xf]
  %v333 = vld [vmem:[%s34 + $0x5c] sm:$0xf]
  %v334 = vld [vmem:[%s34 + $0x60] sm:$0xf]
  %v335 = vld [vmem:[%s34 + $0x64] sm:$0xf]
  %v336 = vld [vmem:[%s34 + $0x68] sm:$0xf]
  %v337 = vld [vmem:[%s34 + $0x6c] sm:$0xf]
  %v338 = vld [vmem:[%s34 + $0x70] sm:$0xf]
  %v339 = vld [vmem:[%s34 + $0x74] sm:$0xf]
  %v340 = vld [vmem:[%s34 + $0x78] sm:$0xf]
  %v341 = vld [vmem:[%s34 + $0x7c] sm:$0xf]
  %v342 = vld [vmem:[%s34 + $0x80] sm:$0xf]
  %v343 = vld [vmem:[%s34 + $0x84] sm:$0xf]
  %v344 = vld [vmem:[%s34 + $0x88] sm:$0xf]
  %v345 = vld [vmem:[%s34 + $0x8c] sm:$0xf]
  %v346 = vld [vmem:[%s34 + $0x90] sm:$0xf]
  %v347 = vld [vmem:[%s34 + $0x94] sm:$0xf]
  %v348 = vld [vmem:[%s34 + $0x98] sm:$0xf]
  %v349 = vld [vmem:[%s34 + $0x9c] sm:$0xf]
  %v350 = vld [vmem:[%s34 + $0xa0] sm:$0xf]
  %v351 = vld [vmem:[%s34 + $0xa4] sm:$0xf]
  %v352 = vld [vmem:[%s34 + $0xa8] sm:$0xf]
  %v353 = vld [vmem:[%s34 + $0xac] sm:$0xf]
  %v354 = vld [vmem:[%s34 + $0xb0] sm:$0xf]
  %v355 = vld [vmem:[%s34 + $0xb4] sm:$0xf]
  %v356 = vld [vmem:[%s34 + $0xb8] sm:$0xf]
  %v357 = vld [vmem:[%s34 + $0xbc] sm:$0xf]
  %v358 = vld [vmem:[%s34 + $0xc0] sm:$0xf]
  %v359 = vld [vmem:[%s34 + $0xc4] sm:$0xf]
  %v360 = vld [vmem:[%s34 + $0xc8] sm:$0xf]
  %v361 = vld [vmem:[%s34 + $0xcc] sm:$0xf]
  %v362 = vld [vmem:[%s34 + $0xd0] sm:$0xf]
  %v363 = vld [vmem:[%s34 + $0xd4] sm:$0xf]
  %v364 = vld [vmem:[%s34 + $0xd8] sm:$0xf]
  %v365 = vld [vmem:[%s34 + $0xdc] sm:$0xf]
  %v366 = vld [vmem:[%s34 + $0xe0] sm:$0xf]
  %v367 = vld [vmem:[%s34 + $0xe4] sm:$0xf]
  %v368 = vld [vmem:[%s34 + $0xe8] sm:$0xf]
  %v369 = vld [vmem:[%s34 + $0xec] sm:$0xf]
  %v370 = vld [vmem:[%s34 + $0xf0] sm:$0xf]
  %v371 = vld [vmem:[%s34 + $0xf4] sm:$0xf]
  %v372 = vld [vmem:[%s34 + $0xf8] sm:$0xf]
  %v373 = vld [vmem:[%s34 + $0xfc] sm:$0xf]
  %v374 = vld [vmem:[%s34 + $0x100] sm:$0xf]
  %v375 = vld [vmem:[%s34 + $0x104] sm:$0xf]
  %v376 = vld [vmem:[%s34 + $0x108] sm:$0xf]
  %v377 = vld [vmem:[%s34 + $0x10c] sm:$0xf]
  %v378 = vld [vmem:[%s34 + $0x110] sm:$0xf]
  %v379 = vld [vmem:[%s34 + $0x114] sm:$0xf]
  %v380 = vld [vmem:[%s34 + $0x118] sm:$0xf]
  %v381 = vld [vmem:[%s34 + $0x11c] sm:$0xf]
  %v382 = vld [vmem:[%s34 + $0x120] sm:$0xf]
  %v383 = vld [vmem:[%s34 + $0x124] sm:$0xf]
  %v384 = vld [vmem:[%s34 + $0x128] sm:$0xf]
  %v385 = vld [vmem:[%s34 + $0x12c] sm:$0xf]
  %v386 = vld [vmem:[%s34 + $0x130] sm:$0xf]
  %v387 = vld [vmem:[%s34 + $0x134] sm:$0xf]
  %v388 = vld [vmem:[%s34 + $0x138] sm:$0xf]
  %v389 = vld [vmem:[%s34 + $0x13c] sm:$0xf]
  %v390 = vld [vmem:[%s34 + $0x140] sm:$0xf]
  %v391 = vld [vmem:[%s34 + $0x144] sm:$0xf]
  %v392 = vld [vmem:[%s34 + $0x148] sm:$0xf]
  %v393 = vld [vmem:[%s34 + $0x14c] sm:$0xf]
  %v394 = vld [vmem:[%s34 + $0x150] sm:$0xf]
  %v395 = vld [vmem:[%s34 + $0x154] sm:$0xf]
  %v396 = vld [vmem:[%s34 + $0x158] sm:$0xf]
  %v397 = vld [vmem:[%s34 + $0x15c] sm:$0xf]
  %v398 = vld [vmem:[%s34 + $0x160] sm:$0xf]
  %v399 = vld [vmem:[%s34 + $0x164] sm:$0xf]
  %v400 = vld [vmem:[%s34 + $0x168] sm:$0xf]
  %v401 = vld [vmem:[%s34 + $0x16c] sm:$0xf]
  %v402 = vld [vmem:[%s34 + $0x170] sm:$0xf]
  %v403 = vld [vmem:[%s34 + $0x174] sm:$0xf]
  %v404 = vld [vmem:[%s34 + $0x178] sm:$0xf]
  %v405 = vld [vmem:[%s34 + $0x17c] sm:$0xf]
  %v406 = vld [vmem:[%s34 + $0x180] sm:$0xf]
  %v407 = vld [vmem:[%s34 + $0x184] sm:$0xf]
  %v408 = vld [vmem:[%s34 + $0x188] sm:$0xf]
  %v409 = vld [vmem:[%s34 + $0x18c] sm:$0xf]
  %v410 = vld [vmem:[%s34 + $0x190] sm:$0xf]
  %v411 = vld [vmem:[%s34 + $0x194] sm:$0xf]
  %v412 = vld [vmem:[%s34 + $0x198] sm:$0xf]
  %v413 = vld [vmem:[%s34 + $0x19c] sm:$0xf]
  %v414 = vld [vmem:[%s34 + $0x1a0] sm:$0xf]
  %v415 = vld [vmem:[%s34 + $0x1a4] sm:$0xf]
  %v416 = vld [vmem:[%s34 + $0x1a8] sm:$0xf]
  %v417 = vld [vmem:[%s34 + $0x1ac] sm:$0xf]
  %v418 = vld [vmem:[%s34 + $0x1b0] sm:$0xf]
  %v419 = vld [vmem:[%s34 + $0x1b4] sm:$0xf]
  %v420 = vld [vmem:[%s34 + $0x1b8] sm:$0xf]
  %v421 = vld [vmem:[%s34 + $0x1bc] sm:$0xf]
  %v422 = vld [vmem:[%s34 + $0x1c0] sm:$0xf]
  %v423 = vld [vmem:[%s34 + $0x1c4] sm:$0xf]
  %v424 = vld [vmem:[%s34 + $0x1c8] sm:$0xf]
  %v425 = vld [vmem:[%s34 + $0x1cc] sm:$0xf]
  %v426 = vld [vmem:[%s34 + $0x1d0] sm:$0xf]
  %v427 = vld [vmem:[%s34 + $0x1d4] sm:$0xf]
  %v428 = vld [vmem:[%s34 + $0x1d8] sm:$0xf]
  %v429 = vld [vmem:[%s34 + $0x1dc] sm:$0xf]
  %v430 = vld [vmem:[%s34 + $0x1e0] sm:$0xf]
  %v431 = vld [vmem:[%s34 + $0x1e4] sm:$0xf]
  %v432 = vld [vmem:[%s34 + $0x1e8] sm:$0xf]
  %v433 = vld [vmem:[%s34 + $0x1ec] sm:$0xf]
  %v434 = vld [vmem:[%s34 + $0x1f0] sm:$0xf]
  %v435 = vld [vmem:[%s34 + $0x1f4] sm:$0xf]
  %v436 = vld [vmem:[%s34 + $0x1f8] sm:$0xf]
  %v437 = vld [vmem:[%s34 + $0x1fc] sm:$0xf]
  %v438 = vld [vmem:[%s1] sm:$0xf]
  %v439 = vld [vmem:[%s1 + $0x4] sm:$0xf]
  %v440 = vld [vmem:[%s1 + $0x8] sm:$0xf]
  %v441 = vld [vmem:[%s1 + $0xc] sm:$0xf]
  %v442 = vld [vmem:[%s1 + $0x10] sm:$0xf]
  %v443 = vld [vmem:[%s1 + $0x14] sm:$0xf]
  %v444 = vld [vmem:[%s1 + $0x18] sm:$0xf]
  %v445 = vld [vmem:[%s1 + $0x1c] sm:$0xf]
  %v446 = vld [vmem:[%s1 + $0x20] sm:$0xf]
  %v447 = vld [vmem:[%s1 + $0x24] sm:$0xf]
  %v448 = vld [vmem:[%s1 + $0x28] sm:$0xf]
  %v449 = vld [vmem:[%s1 + $0x2c] sm:$0xf]
  %v450 = vld [vmem:[%s1 + $0x30] sm:$0xf]
  %v451 = vld [vmem:[%s1 + $0x34] sm:$0xf]
  %v452 = vld [vmem:[%s1 + $0x38] sm:$0xf]
  %v453 = vld [vmem:[%s1 + $0x3c] sm:$0xf]
  %v582 = vunpack.c.l.b16 %v310
  %v583 = vunpack.c.l.b16 %v311
  %v584 = vunpack.c.l.b16 %v312
  %v585 = vunpack.c.l.b16 %v313
  %v586 = vunpack.c.l.b16 %v314
  %v587 = vunpack.c.l.b16 %v315
  %v588 = vunpack.c.l.b16 %v316
  %v589 = vunpack.c.l.b16 %v317
  %v590 = vunpack.c.l.b16 %v318
  %v591 = vunpack.c.l.b16 %v319
  %v592 = vunpack.c.l.b16 %v320
  %v593 = vunpack.c.l.b16 %v321
  %v594 = vunpack.c.l.b16 %v322
  %v595 = vunpack.c.l.b16 %v323
  %v596 = vunpack.c.l.b16 %v324
  %v597 = vunpack.c.l.b16 %v325
  %v598 = vunpack.c.l.b16 %v326
  %v599 = vunpack.c.l.b16 %v327
  %v600 = vunpack.c.l.b16 %v328
  %v601 = vunpack.c.l.b16 %v329
  %v602 = vunpack.c.l.b16 %v330
  %v603 = vunpack.c.l.b16 %v331
  %v604 = vunpack.c.l.b16 %v332
  %v605 = vunpack.c.l.b16 %v333
  %v606 = vunpack.c.l.b16 %v334
  %v607 = vunpack.c.l.b16 %v335
  %v608 = vunpack.c.l.b16 %v336
  %v609 = vunpack.c.l.b16 %v337
  %v610 = vunpack.c.l.b16 %v338
  %v611 = vunpack.c.l.b16 %v339
  %v612 = vunpack.c.l.b16 %v340
  %v613 = vunpack.c.l.b16 %v341
  %v614 = vunpack.c.l.b16 %v342
  %v615 = vunpack.c.l.b16 %v343
  %v616 = vunpack.c.l.b16 %v344
  %v617 = vunpack.c.l.b16 %v345
  %v618 = vunpack.c.l.b16 %v346
  %v619 = vunpack.c.l.b16 %v347
  %v620 = vunpack.c.l.b16 %v348
  %v621 = vunpack.c.l.b16 %v349
  %v622 = vunpack.c.l.b16 %v350
  %v623 = vunpack.c.l.b16 %v351
  %v624 = vunpack.c.l.b16 %v352
  %v625 = vunpack.c.l.b16 %v353
  %v626 = vunpack.c.l.b16 %v354
  %v627 = vunpack.c.l.b16 %v355
  %v628 = vunpack.c.l.b16 %v356
  %v629 = vunpack.c.l.b16 %v357
  %v630 = vunpack.c.l.b16 %v358
  %v631 = vunpack.c.l.b16 %v359
  %v632 = vunpack.c.l.b16 %v360
  %v633 = vunpack.c.l.b16 %v361
  %v634 = vunpack.c.l.b16 %v362
  %v635 = vunpack.c.l.b16 %v363
  %v636 = vunpack.c.l.b16 %v364
  %v637 = vunpack.c.l.b16 %v365
  %v638 = vunpack.c.l.b16 %v366
  %v639 = vunpack.c.l.b16 %v367
  %v640 = vunpack.c.l.b16 %v368
  %v641 = vunpack.c.l.b16 %v369
  %v642 = vunpack.c.l.b16 %v370
  %v643 = vunpack.c.l.b16 %v371
  %v644 = vunpack.c.l.b16 %v372
  %v645 = vunpack.c.l.b16 %v373
  %v646 = vunpack.c.l.b16 %v374
  %v647 = vunpack.c.l.b16 %v375
  %v648 = vunpack.c.l.b16 %v376
  %v649 = vunpack.c.l.b16 %v377
  %v650 = vunpack.c.l.b16 %v378
  %v651 = vunpack.c.l.b16 %v379
  %v652 = vunpack.c.l.b16 %v380
  %v653 = vunpack.c.l.b16 %v381
  %v654 = vunpack.c.l.b16 %v382
  %v655 = vunpack.c.l.b16 %v383
  %v656 = vunpack.c.l.b16 %v384
  %v657 = vunpack.c.l.b16 %v385
  %v658 = vunpack.c.l.b16 %v386
  %v659 = vunpack.c.l.b16 %v387
  %v660 = vunpack.c.l.b16 %v388
  %v661 = vunpack.c.l.b16 %v389
  %v662 = vunpack.c.l.b16 %v390
  %v663 = vunpack.c.l.b16 %v391
  %v664 = vunpack.c.l.b16 %v392
  %v665 = vunpack.c.l.b16 %v393
  %v666 = vunpack.c.l.b16 %v394
  %v667 = vunpack.c.l.b16 %v395
  %v668 = vunpack.c.l.b16 %v396
  %v669 = vunpack.c.l.b16 %v397
  %v670 = vunpack.c.l.b16 %v398
  %v671 = vunpack.c.l.b16 %v399
  %v672 = vunpack.c.l.b16 %v400
  %v673 = vunpack.c.l.b16 %v401
  %v674 = vunpack.c.l.b16 %v402
  %v675 = vunpack.c.l.b16 %v403
  %v676 = vunpack.c.l.b16 %v404
  %v677 = vunpack.c.l.b16 %v405
  %v678 = vunpack.c.l.b16 %v406
  %v679 = vunpack.c.l.b16 %v407
  %v680 = vunpack.c.l.b16 %v408
  %v681 = vunpack.c.l.b16 %v409
  %v682 = vunpack.c.l.b16 %v410
  %v683 = vunpack.c.l.b16 %v411
  %v684 = vunpack.c.l.b16 %v412
  %v685 = vunpack.c.l.b16 %v413
  %v686 = vunpack.c.l.b16 %v414
  %v687 = vunpack.c.l.b16 %v415
  %v688 = vunpack.c.l.b16 %v416
  %v689 = vunpack.c.l.b16 %v417
  %v690 = vunpack.c.l.b16 %v418
  %v691 = vunpack.c.l.b16 %v419
  %v692 = vunpack.c.l.b16 %v420
  %v693 = vunpack.c.l.b16 %v421
  %v694 = vunpack.c.l.b16 %v422
  %v695 = vunpack.c.l.b16 %v423
  %v696 = vunpack.c.l.b16 %v424
  %v697 = vunpack.c.l.b16 %v425
  %v698 = vunpack.c.l.b16 %v426
  %v699 = vunpack.c.l.b16 %v427
  %v700 = vunpack.c.l.b16 %v428
  %v701 = vunpack.c.l.b16 %v429
  %v702 = vunpack.c.l.b16 %v430
  %v703 = vunpack.c.l.b16 %v431
  %v704 = vunpack.c.l.b16 %v432
  %v705 = vunpack.c.l.b16 %v433
  %v706 = vunpack.c.l.b16 %v434
  %v707 = vunpack.c.l.b16 %v435
  %v708 = vunpack.c.l.b16 %v436
  %v709 = vunpack.c.l.b16 %v437
  %v710 = vpack.c.b16 %v583, %v582
  %v711 = vpack.c.b16 %v585, %v584
  %v712 = vpack.c.b16 %v587, %v586
  %v713 = vpack.c.b16 %v589, %v588
  %v714 = vpack.c.b16 %v591, %v590
  %v715 = vpack.c.b16 %v593, %v592
  %v716 = vpack.c.b16 %v595, %v594
  %v717 = vpack.c.b16 %v597, %v596
  %v718 = vpack.c.b16 %v599, %v598
  %v719 = vpack.c.b16 %v601, %v600
  %v720 = vpack.c.b16 %v603, %v602
  %v721 = vpack.c.b16 %v605, %v604
  %v722 = vpack.c.b16 %v607, %v606
  %v723 = vpack.c.b16 %v609, %v608
  %v724 = vpack.c.b16 %v611, %v610
  %v725 = vpack.c.b16 %v613, %v612
  %v726 = vpack.c.b16 %v615, %v614
  %v727 = vpack.c.b16 %v617, %v616
  %v728 = vpack.c.b16 %v619, %v618
  %v729 = vpack.c.b16 %v621, %v620
  %v730 = vpack.c.b16 %v623, %v622
  %v731 = vpack.c.b16 %v625, %v624
  %v732 = vpack.c.b16 %v627, %v626
  %v733 = vpack.c.b16 %v629, %v628
  %v734 = vpack.c.b16 %v631, %v630
  %v735 = vpack.c.b16 %v633, %v632
  %v736 = vpack.c.b16 %v635, %v634
  %v737 = vpack.c.b16 %v637, %v636
  %v738 = vpack.c.b16 %v639, %v638
  %v739 = vpack.c.b16 %v641, %v640
  %v740 = vpack.c.b16 %v643, %v642
  %v741 = vpack.c.b16 %v645, %v644
  %v742 = vpack.c.b16 %v647, %v646
  %v743 = vpack.c.b16 %v649, %v648
  %v744 = vpack.c.b16 %v651, %v650
  %v745 = vpack.c.b16 %v653, %v652
  %v746 = vpack.c.b16 %v655, %v654
  %v747 = vpack.c.b16 %v657, %v656
  %v748 = vpack.c.b16 %v659, %v658
  %v749 = vpack.c.b16 %v661, %v660
  %v750 = vpack.c.b16 %v663, %v662
  %v751 = vpack.c.b16 %v665, %v664
  %v752 = vpack.c.b16 %v667, %v666
  %v753 = vpack.c.b16 %v669, %v668
  %v754 = vpack.c.b16 %v671, %v670
  %v755 = vpack.c.b16 %v673, %v672
  %v756 = vpack.c.b16 %v675, %v674
  %v757 = vpack.c.b16 %v677, %v676
  %v758 = vpack.c.b16 %v679, %v678
  %v759 = vpack.c.b16 %v681, %v680
  %v760 = vpack.c.b16 %v683, %v682
  %v761 = vpack.c.b16 %v685, %v684
  %v762 = vpack.c.b16 %v687, %v686
  %v763 = vpack.c.b16 %v689, %v688
  %v764 = vpack.c.b16 %v691, %v690
  %v765 = vpack.c.b16 %v693, %v692
  %v766 = vpack.c.b16 %v695, %v694
  %v767 = vpack.c.b16 %v697, %v696
  %v768 = vpack.c.b16 %v699, %v698
  %v769 = vpack.c.b16 %v701, %v700
  %v770 = vpack.c.b16 %v703, %v702
  %v771 = vpack.c.b16 %v705, %v704
  %v772 = vpack.c.b16 %v707, %v706
  %v773 = vpack.c.b16 %v709, %v708
  %v854 = vunpack.c.l.b16 %v438
  %v855 = vunpack.c.l.b16 %v439
  %v856 = vunpack.c.l.b16 %v440
  %v857 = vunpack.c.l.b16 %v441
  %v858 = vunpack.c.l.b16 %v442
  %v859 = vunpack.c.l.b16 %v443
  %v860 = vunpack.c.l.b16 %v444
  %v861 = vunpack.c.l.b16 %v445
  %v862 = vunpack.c.l.b16 %v446
  %v863 = vunpack.c.l.b16 %v447
  %v864 = vunpack.c.l.b16 %v448
  %v865 = vunpack.c.l.b16 %v449
  %v866 = vunpack.c.l.b16 %v450
  %v867 = vunpack.c.l.b16 %v451
  %v868 = vunpack.c.l.b16 %v452
  %v869 = vunpack.c.l.b16 %v453
  %v870 = vpack.c.b16 %v855, %v854
  %v871 = vpack.c.b16 %v857, %v856
  %v872 = vpack.c.b16 %v859, %v858
  %v873 = vpack.c.b16 %v861, %v860
  %v874 = vpack.c.b16 %v863, %v862
  %v875 = vpack.c.b16 %v865, %v864
  %v876 = vpack.c.b16 %v867, %v866
  %v877 = vpack.c.b16 %v869, %v868
  %886 = vmatprep.subr.bf16.mxu0 0
  %887 = vmatpush1.bf16.msra.mxu0 %v877
  %888 = vmatprep.subr.bf16.mxu0 0
  %889 = vmatpush1.bf16.msra.mxu0 %v876
  %890 = vmatprep.subr.bf16.mxu0 0
  %891 = vmatpush1.bf16.msra.mxu0 %v875
  %892 = vmatprep.subr.bf16.mxu0 0
  %893 = vmatpush1.bf16.msra.mxu0 %v874
  %894 = vmatprep.subr.bf16.mxu0 0
  %895 = vmatpush1.bf16.msra.mxu0 %v873
  %896 = vmatprep.subr.bf16.mxu0 0
  %897 = vmatpush1.bf16.msra.mxu0 %v872
  %898 = vmatprep.subr.bf16.mxu0 0
  %899 = vmatpush1.bf16.msra.mxu0 %v871
  %900 = vmatprep.subr.bf16.mxu0 0
  %901 = vmatpush1.bf16.msra.mxu0 %v870
  %902 = vmatprep.subr.bf16.mxu0 0
  %903 = vmatpush2.bf16.msra.mxu0 0
  %904 = vmatprep.subr.bf16.mxu0 0
  %905 = vmatpush2.bf16.msra.mxu0 0
  %906 = vmatprep.subr.bf16.mxu0 0
  %907 = vmatpush2.bf16.msra.mxu0 0
  %908 = vmatprep.subr.bf16.mxu0 0
  %909 = vmatpush2.bf16.msra.mxu0 0
  %910 = vmatprep.subr.bf16.mxu0 0
  %911 = vmatpush2.bf16.msra.mxu0 0
  %912 = vmatprep.subr.bf16.mxu0 0
  %913 = vmatpush2.bf16.msra.mxu0 0
  %914 = vmatprep.subr.bf16.mxu0 0
  %915 = vmatpush2.bf16.msra.mxu0 0
  %916 = vmatprep.subr.bf16.mxu0 0
  %917 = vmatpush2.bf16.msra.mxu0 0
  %918 = vmatprep.mubr.bf16.mxu0 0
  %919 = vmatmul.mubr.bf16.gmra.mxu0 %v710
  %v920 = vpop.f32.mrf.mxu0
  %v921 = vadd.f32 0.0, %v920
  %v922 = vpop.f32.mrf.mxu0
  %v923 = vpop.f32.mrf.mxu0
  %v924 = vadd.f32 0.0, %v923
  %v925 = vpop.f32.mrf.mxu0
  %926 = vmatprep.mubr.bf16.mxu0 0
  %927 = vmatmul.mubr.bf16.gmra.mxu0 %v711
  %v928 = vpop.f32.mrf.mxu0
  %v929 = vadd.f32 0.0, %v928
  %v930 = vpop.f32.mrf.mxu0
  %v931 = vpop.f32.mrf.mxu0
  %v932 = vadd.f32 0.0, %v931
  %v933 = vpop.f32.mrf.mxu0
  %934 = vmatprep.mubr.bf16.mxu0 0
  %935 = vmatmul.mubr.bf16.gmra.mxu0 %v712
  %v936 = vpop.f32.mrf.mxu0
  %v937 = vadd.f32 0.0, %v936
  %v938 = vpop.f32.mrf.mxu0
  %v939 = vpop.f32.mrf.mxu0
  %v940 = vadd.f32 0.0, %v939
  %v941 = vpop.f32.mrf.mxu0
  %942 = vmatprep.mubr.bf16.mxu0 0
  %943 = vmatmul.mubr.bf16.gmra.mxu0 %v713
  %v944 = vpop.f32.mrf.mxu0
  %v945 = vadd.f32 0.0, %v944
  %v946 = vpop.f32.mrf.mxu0
  %v947 = vpop.f32.mrf.mxu0
  %v948 = vadd.f32 0.0, %v947
  %v949 = vpop.f32.mrf.mxu0
  %950 = vmatprep.mubr.bf16.mxu0 0
  %951 = vmatmul.mubr.bf16.gmra.mxu0 %v714
  %v952 = vpop.f32.mrf.mxu0
  %v953 = vadd.f32 0.0, %v952
  %v954 = vpop.f32.mrf.mxu0
  %v955 = vpop.f32.mrf.mxu0
  %v956 = vadd.f32 0.0, %v955
  %v957 = vpop.f32.mrf.mxu0
  %958 = vmatprep.mubr.bf16.mxu0 0
  %959 = vmatmul.mubr.bf16.gmra.mxu0 %v715
  %v960 = vpop.f32.mrf.mxu0
  %v961 = vadd.f32 0.0, %v960
  %v962 = vpop.f32.mrf.mxu0
  %v963 = vpop.f32.mrf.mxu0
  %v964 = vadd.f32 0.0, %v963
  %v965 = vpop.f32.mrf.mxu0
  %966 = vmatprep.mubr.bf16.mxu0 0
  %967 = vmatmul.mubr.bf16.gmra.mxu0 %v716
  %v968 = vpop.f32.mrf.mxu0
  %v969 = vadd.f32 0.0, %v968
  %v970 = vpop.f32.mrf.mxu0
  %v971 = vpop.f32.mrf.mxu0
  %v972 = vadd.f32 0.0, %v971
  %v973 = vpop.f32.mrf.mxu0
  %974 = vmatprep.mubr.bf16.mxu0 0
  %975 = vmatmul.mubr.bf16.gmra.mxu0 %v717
  %v976 = vpop.f32.mrf.mxu0
  %v977 = vadd.f32 0.0, %v976
  %v978 = vpop.f32.mrf.mxu0
  %v979 = vpop.f32.mrf.mxu0
  %v980 = vadd.f32 0.0, %v979
  %v981 = vpop.f32.mrf.mxu0
  %982 = vmatprep.mubr.bf16.mxu0 0
  %983 = vmatmul.mubr.bf16.gmra.mxu0 %v718
  %v984 = vpop.f32.mrf.mxu0
  %v985 = vadd.f32 0.0, %v984
  %v986 = vpop.f32.mrf.mxu0
  %v987 = vpop.f32.mrf.mxu0
  %v988 = vadd.f32 0.0, %v987
  %v989 = vpop.f32.mrf.mxu0
  %990 = vmatprep.mubr.bf16.mxu0 0
  %991 = vmatmul.mubr.bf16.gmra.mxu0 %v719
  %v992 = vpop.f32.mrf.mxu0
  %v993 = vadd.f32 0.0, %v992
  %v994 = vpop.f32.mrf.mxu0
  %v995 = vpop.f32.mrf.mxu0
  %v996 = vadd.f32 0.0, %v995
  %v997 = vpop.f32.mrf.mxu0
  %998 = vmatprep.mubr.bf16.mxu0 0
  %999 = vmatmul.mubr.bf16.gmra.mxu0 %v720
  %v1000 = vpop.f32.mrf.mxu0
  %v1001 = vadd.f32 0.0, %v1000
  %v1002 = vpop.f32.mrf.mxu0
  %v1003 = vpop.f32.mrf.mxu0
  %v1004 = vadd.f32 0.0, %v1003
  %v1005 = vpop.f32.mrf.mxu0
  %1006 = vmatprep.mubr.bf16.mxu0 0
  %1007 = vmatmul.mubr.bf16.gmra.mxu0 %v721
  %v1008 = vpop.f32.mrf.mxu0
  %v1009 = vadd.f32 0.0, %v1008
  %v1010 = vpop.f32.mrf.mxu0
  %v1011 = vpop.f32.mrf.mxu0
  %v1012 = vadd.f32 0.0, %v1011
  %v1013 = vpop.f32.mrf.mxu0
  %1014 = vmatprep.mubr.bf16.mxu0 0
  %1015 = vmatmul.mubr.bf16.gmra.mxu0 %v722
  %v1016 = vpop.f32.mrf.mxu0
  %v1017 = vadd.f32 0.0, %v1016
  %v1018 = vpop.f32.mrf.mxu0
  %v1019 = vpop.f32.mrf.mxu0
  %v1020 = vadd.f32 0.0, %v1019
  %v1021 = vpop.f32.mrf.mxu0
  %1022 = vmatprep.mubr.bf16.mxu0 0
  %1023 = vmatmul.mubr.bf16.gmra.mxu0 %v723
  %v1024 = vpop.f32.mrf.mxu0
  %v1025 = vadd.f32 0.0, %v1024
  %v1026 = vpop.f32.mrf.mxu0
  %v1027 = vpop.f32.mrf.mxu0
  %v1028 = vadd.f32 0.0, %v1027
  %v1029 = vpop.f32.mrf.mxu0
  %1030 = vmatprep.mubr.bf16.mxu0 0
  %1031 = vmatmul.mubr.bf16.gmra.mxu0 %v724
  %v1032 = vpop.f32.mrf.mxu0
  %v1033 = vadd.f32 0.0, %v1032
  %v1034 = vpop.f32.mrf.mxu0
  %v1035 = vpop.f32.mrf.mxu0
  %v1036 = vadd.f32 0.0, %v1035
  %v1037 = vpop.f32.mrf.mxu0
  %1038 = vmatprep.mubr.bf16.mxu0 0
  %1039 = vmatmul.mubr.bf16.gmra.mxu0 %v725
  %v1040 = vpop.f32.mrf.mxu0
  %v1041 = vadd.f32 0.0, %v1040
  %v1042 = vpop.f32.mrf.mxu0
  %v1043 = vpop.f32.mrf.mxu0
  %v1044 = vadd.f32 0.0, %v1043
  %v1045 = vpop.f32.mrf.mxu0
  %1046 = vmatprep.mubr.bf16.mxu0 0
  %1047 = vmatmul.mubr.bf16.gmra.mxu0 %v726
  %v1048 = vpop.f32.mrf.mxu0
  %v1049 = vadd.f32 0.0, %v1048
  %v1050 = vpop.f32.mrf.mxu0
  %v1051 = vpop.f32.mrf.mxu0
  %v1052 = vadd.f32 0.0, %v1051
  %v1053 = vpop.f32.mrf.mxu0
  %1054 = vmatprep.mubr.bf16.mxu0 0
  %1055 = vmatmul.mubr.bf16.gmra.mxu0 %v727
  %v1056 = vpop.f32.mrf.mxu0
  %v1057 = vadd.f32 0.0, %v1056
  %v1058 = vpop.f32.mrf.mxu0
  %v1059 = vpop.f32.mrf.mxu0
  %v1060 = vadd.f32 0.0, %v1059
  %v1061 = vpop.f32.mrf.mxu0
  %1062 = vmatprep.mubr.bf16.mxu0 0
  %1063 = vmatmul.mubr.bf16.gmra.mxu0 %v728
  %v1064 = vpop.f32.mrf.mxu0
  %v1065 = vadd.f32 0.0, %v1064
  %v1066 = vpop.f32.mrf.mxu0
  %v1067 = vpop.f32.mrf.mxu0
  %v1068 = vadd.f32 0.0, %v1067
  %v1069 = vpop.f32.mrf.mxu0
  %1070 = vmatprep.mubr.bf16.mxu0 0
  %1071 = vmatmul.mubr.bf16.gmra.mxu0 %v729
  %v1072 = vpop.f32.mrf.mxu0
  %v1073 = vadd.f32 0.0, %v1072
  %v1074 = vpop.f32.mrf.mxu0
  %v1075 = vpop.f32.mrf.mxu0
  %v1076 = vadd.f32 0.0, %v1075
  %v1077 = vpop.f32.mrf.mxu0
  %1078 = vmatprep.mubr.bf16.mxu0 0
  %1079 = vmatmul.mubr.bf16.gmra.mxu0 %v730
  %v1080 = vpop.f32.mrf.mxu0
  %v1081 = vadd.f32 0.0, %v1080
  %v1082 = vpop.f32.mrf.mxu0
  %v1083 = vpop.f32.mrf.mxu0
  %v1084 = vadd.f32 0.0, %v1083
  %v1085 = vpop.f32.mrf.mxu0
  %1086 = vmatprep.mubr.bf16.mxu0 0
  %1087 = vmatmul.mubr.bf16.gmra.mxu0 %v731
  %v1088 = vpop.f32.mrf.mxu0
  %v1089 = vadd.f32 0.0, %v1088
  %v1090 = vpop.f32.mrf.mxu0
  %v1091 = vpop.f32.mrf.mxu0
  %v1092 = vadd.f32 0.0, %v1091
  %v1093 = vpop.f32.mrf.mxu0
  %1094 = vmatprep.mubr.bf16.mxu0 0
  %1095 = vmatmul.mubr.bf16.gmra.mxu0 %v732
  %v1096 = vpop.f32.mrf.mxu0
  %v1097 = vadd.f32 0.0, %v1096
  %v1098 = vpop.f32.mrf.mxu0
  %v1099 = vpop.f32.mrf.mxu0
  %v1100 = vadd.f32 0.0, %v1099
  %v1101 = vpop.f32.mrf.mxu0
  %1102 = vmatprep.mubr.bf16.mxu0 0
  %1103 = vmatmul.mubr.bf16.gmra.mxu0 %v733
  %v1104 = vpop.f32.mrf.mxu0
  %v1105 = vadd.f32 0.0, %v1104
  %v1106 = vpop.f32.mrf.mxu0
  %v1107 = vpop.f32.mrf.mxu0
  %v1108 = vadd.f32 0.0, %v1107
  %v1109 = vpop.f32.mrf.mxu0
  %1110 = vmatprep.mubr.bf16.mxu0 0
  %1111 = vmatmul.mubr.bf16.gmra.mxu0 %v734
  %v1112 = vpop.f32.mrf.mxu0
  %v1113 = vadd.f32 0.0, %v1112
  %v1114 = vpop.f32.mrf.mxu0
  %v1115 = vpop.f32.mrf.mxu0
  %v1116 = vadd.f32 0.0, %v1115
  %v1117 = vpop.f32.mrf.mxu0
  %1118 = vmatprep.mubr.bf16.mxu0 0
  %1119 = vmatmul.mubr.bf16.gmra.mxu0 %v735
  %v1120 = vpop.f32.mrf.mxu0
  %v1121 = vadd.f32 0.0, %v1120
  %v1122 = vpop.f32.mrf.mxu0
  %v1123 = vpop.f32.mrf.mxu0
  %v1124 = vadd.f32 0.0, %v1123
  %v1125 = vpop.f32.mrf.mxu0
  %1126 = vmatprep.mubr.bf16.mxu0 0
  %1127 = vmatmul.mubr.bf16.gmra.mxu0 %v736
  %v1128 = vpop.f32.mrf.mxu0
  %v1129 = vadd.f32 0.0, %v1128
  %v1130 = vpop.f32.mrf.mxu0
  %v1131 = vpop.f32.mrf.mxu0
  %v1132 = vadd.f32 0.0, %v1131
  %v1133 = vpop.f32.mrf.mxu0
  %1134 = vmatprep.mubr.bf16.mxu0 0
  %1135 = vmatmul.mubr.bf16.gmra.mxu0 %v737
  %v1136 = vpop.f32.mrf.mxu0
  %v1137 = vadd.f32 0.0, %v1136
  %v1138 = vpop.f32.mrf.mxu0
  %v1139 = vpop.f32.mrf.mxu0
  %v1140 = vadd.f32 0.0, %v1139
  %v1141 = vpop.f32.mrf.mxu0
  %1142 = vmatprep.mubr.bf16.mxu0 0
  %1143 = vmatmul.mubr.bf16.gmra.mxu0 %v738
  %v1144 = vpop.f32.mrf.mxu0
  %v1145 = vadd.f32 0.0, %v1144
  %v1146 = vpop.f32.mrf.mxu0
  %v1147 = vpop.f32.mrf.mxu0
  %v1148 = vadd.f32 0.0, %v1147
  %v1149 = vpop.f32.mrf.mxu0
  %1150 = vmatprep.mubr.bf16.mxu0 0
  %1151 = vmatmul.mubr.bf16.gmra.mxu0 %v739
  %v1152 = vpop.f32.mrf.mxu0
  %v1153 = vadd.f32 0.0, %v1152
  %v1154 = vpop.f32.mrf.mxu0
  %v1155 = vpop.f32.mrf.mxu0
  %v1156 = vadd.f32 0.0, %v1155
  %v1157 = vpop.f32.mrf.mxu0
  %1158 = vmatprep.mubr.bf16.mxu0 0
  %1159 = vmatmul.mubr.bf16.gmra.mxu0 %v740
  %v1160 = vpop.f32.mrf.mxu0
  %v1161 = vadd.f32 0.0, %v1160
  %v1162 = vpop.f32.mrf.mxu0
  %v1163 = vpop.f32.mrf.mxu0
  %v1164 = vadd.f32 0.0, %v1163
  %v1165 = vpop.f32.mrf.mxu0
  %1166 = vmatprep.mubr.bf16.mxu0 0
  %1167 = vmatmul.mubr.bf16.gmra.mxu0 %v741
  %v1168 = vpop.f32.mrf.mxu0
  %v1169 = vadd.f32 0.0, %v1168
  %v1170 = vpop.f32.mrf.mxu0
  %v1171 = vpop.f32.mrf.mxu0
  %v1172 = vadd.f32 0.0, %v1171
  %v1173 = vpop.f32.mrf.mxu0
  %1174 = vmatprep.mubr.bf16.mxu0 0
  %1175 = vmatmul.mubr.bf16.gmra.mxu0 %v742
  %v1176 = vpop.f32.mrf.mxu0
  %v1177 = vadd.f32 0.0, %v1176
  %v1178 = vpop.f32.mrf.mxu0
  %v1179 = vpop.f32.mrf.mxu0
  %v1180 = vadd.f32 0.0, %v1179
  %v1181 = vpop.f32.mrf.mxu0
  %1182 = vmatprep.mubr.bf16.mxu0 0
  %1183 = vmatmul.mubr.bf16.gmra.mxu0 %v743
  %v1184 = vpop.f32.mrf.mxu0
  %v1185 = vadd.f32 0.0, %v1184
  %v1186 = vpop.f32.mrf.mxu0
  %v1187 = vpop.f32.mrf.mxu0
  %v1188 = vadd.f32 0.0, %v1187
  %v1189 = vpop.f32.mrf.mxu0
  %1190 = vmatprep.mubr.bf16.mxu0 0
  %1191 = vmatmul.mubr.bf16.gmra.mxu0 %v744
  %v1192 = vpop.f32.mrf.mxu0
  %v1193 = vadd.f32 0.0, %v1192
  %v1194 = vpop.f32.mrf.mxu0
  %v1195 = vpop.f32.mrf.mxu0
  %v1196 = vadd.f32 0.0, %v1195
  %v1197 = vpop.f32.mrf.mxu0
  %1198 = vmatprep.mubr.bf16.mxu0 0
  %1199 = vmatmul.mubr.bf16.gmra.mxu0 %v745
  %v1200 = vpop.f32.mrf.mxu0
  %v1201 = vadd.f32 0.0, %v1200
  %v1202 = vpop.f32.mrf.mxu0
  %v1203 = vpop.f32.mrf.mxu0
  %v1204 = vadd.f32 0.0, %v1203
  %v1205 = vpop.f32.mrf.mxu0
  %1206 = vmatprep.mubr.bf16.mxu0 0
  %1207 = vmatmul.mubr.bf16.gmra.mxu0 %v746
  %v1208 = vpop.f32.mrf.mxu0
  %v1209 = vadd.f32 0.0, %v1208
  %v1210 = vpop.f32.mrf.mxu0
  %v1211 = vpop.f32.mrf.mxu0
  %v1212 = vadd.f32 0.0, %v1211
  %v1213 = vpop.f32.mrf.mxu0
  %1214 = vmatprep.mubr.bf16.mxu0 0
  %1215 = vmatmul.mubr.bf16.gmra.mxu0 %v747
  %v1216 = vpop.f32.mrf.mxu0
  %v1217 = vadd.f32 0.0, %v1216
  %v1218 = vpop.f32.mrf.mxu0
  %v1219 = vpop.f32.mrf.mxu0
  %v1220 = vadd.f32 0.0, %v1219
  %v1221 = vpop.f32.mrf.mxu0
  %1222 = vmatprep.mubr.bf16.mxu0 0
  %1223 = vmatmul.mubr.bf16.gmra.mxu0 %v748
  %v1224 = vpop.f32.mrf.mxu0
  %v1225 = vadd.f32 0.0, %v1224
  %v1226 = vpop.f32.mrf.mxu0
  %v1227 = vpop.f32.mrf.mxu0
  %v1228 = vadd.f32 0.0, %v1227
  %v1229 = vpop.f32.mrf.mxu0
  %1230 = vmatprep.mubr.bf16.mxu0 0
  %1231 = vmatmul.mubr.bf16.gmra.mxu0 %v749
  %v1232 = vpop.f32.mrf.mxu0
  %v1233 = vadd.f32 0.0, %v1232
  %v1234 = vpop.f32.mrf.mxu0
  %v1235 = vpop.f32.mrf.mxu0
  %v1236 = vadd.f32 0.0, %v1235
  %v1237 = vpop.f32.mrf.mxu0
  %1238 = vmatprep.mubr.bf16.mxu0 0
  %1239 = vmatmul.mubr.bf16.gmra.mxu0 %v750
  %v1240 = vpop.f32.mrf.mxu0
  %v1241 = vadd.f32 0.0, %v1240
  %v1242 = vpop.f32.mrf.mxu0
  %v1243 = vpop.f32.mrf.mxu0
  %v1244 = vadd.f32 0.0, %v1243
  %v1245 = vpop.f32.mrf.mxu0
  %1246 = vmatprep.mubr.bf16.mxu0 0
  %1247 = vmatmul.mubr.bf16.gmra.mxu0 %v751
  %v1248 = vpop.f32.mrf.mxu0
  %v1249 = vadd.f32 0.0, %v1248
  %v1250 = vpop.f32.mrf.mxu0
  %v1251 = vpop.f32.mrf.mxu0
  %v1252 = vadd.f32 0.0, %v1251
  %v1253 = vpop.f32.mrf.mxu0
  %1254 = vmatprep.mubr.bf16.mxu0 0
  %1255 = vmatmul.mubr.bf16.gmra.mxu0 %v752
  %v1256 = vpop.f32.mrf.mxu0
  %v1257 = vadd.f32 0.0, %v1256
  %v1258 = vpop.f32.mrf.mxu0
  %v1259 = vpop.f32.mrf.mxu0
  %v1260 = vadd.f32 0.0, %v1259
  %v1261 = vpop.f32.mrf.mxu0
  %1262 = vmatprep.mubr.bf16.mxu0 0
  %1263 = vmatmul.mubr.bf16.gmra.mxu0 %v753
  %v1264 = vpop.f32.mrf.mxu0
  %v1265 = vadd.f32 0.0, %v1264
  %v1266 = vpop.f32.mrf.mxu0
  %v1267 = vpop.f32.mrf.mxu0
  %v1268 = vadd.f32 0.0, %v1267
  %v1269 = vpop.f32.mrf.mxu0
  %1270 = vmatprep.mubr.bf16.mxu0 0
  %1271 = vmatmul.mubr.bf16.gmra.mxu0 %v754
  %v1272 = vpop.f32.mrf.mxu0
  %v1273 = vadd.f32 0.0, %v1272
  %v1274 = vpop.f32.mrf.mxu0
  %v1275 = vpop.f32.mrf.mxu0
  %v1276 = vadd.f32 0.0, %v1275
  %v1277 = vpop.f32.mrf.mxu0
  %1278 = vmatprep.mubr.bf16.mxu0 0
  %1279 = vmatmul.mubr.bf16.gmra.mxu0 %v755
  %v1280 = vpop.f32.mrf.mxu0
  %v1281 = vadd.f32 0.0, %v1280
  %v1282 = vpop.f32.mrf.mxu0
  %v1283 = vpop.f32.mrf.mxu0
  %v1284 = vadd.f32 0.0, %v1283
  %v1285 = vpop.f32.mrf.mxu0
  %1286 = vmatprep.mubr.bf16.mxu0 0
  %1287 = vmatmul.mubr.bf16.gmra.mxu0 %v756
  %v1288 = vpop.f32.mrf.mxu0
  %v1289 = vadd.f32 0.0, %v1288
  %v1290 = vpop.f32.mrf.mxu0
  %v1291 = vpop.f32.mrf.mxu0
  %v1292 = vadd.f32 0.0, %v1291
  %v1293 = vpop.f32.mrf.mxu0
  %1294 = vmatprep.mubr.bf16.mxu0 0
  %1295 = vmatmul.mubr.bf16.gmra.mxu0 %v757
  %v1296 = vpop.f32.mrf.mxu0
  %v1297 = vadd.f32 0.0, %v1296
  %v1298 = vpop.f32.mrf.mxu0
  %v1299 = vpop.f32.mrf.mxu0
  %v1300 = vadd.f32 0.0, %v1299
  %v1301 = vpop.f32.mrf.mxu0
  %1302 = vmatprep.mubr.bf16.mxu0 0
  %1303 = vmatmul.mubr.bf16.gmra.mxu0 %v758
  %v1304 = vpop.f32.mrf.mxu0
  %v1305 = vadd.f32 0.0, %v1304
  %v1306 = vpop.f32.mrf.mxu0
  %v1307 = vpop.f32.mrf.mxu0
  %v1308 = vadd.f32 0.0, %v1307
  %v1309 = vpop.f32.mrf.mxu0
  %1310 = vmatprep.mubr.bf16.mxu0 0
  %1311 = vmatmul.mubr.bf16.gmra.mxu0 %v759
  %v1312 = vpop.f32.mrf.mxu0
  %v1313 = vadd.f32 0.0, %v1312
  %v1314 = vpop.f32.mrf.mxu0
  %v1315 = vpop.f32.mrf.mxu0
  %v1316 = vadd.f32 0.0, %v1315
  %v1317 = vpop.f32.mrf.mxu0
  %1318 = vmatprep.mubr.bf16.mxu0 0
  %1319 = vmatmul.mubr.bf16.gmra.mxu0 %v760
  %v1320 = vpop.f32.mrf.mxu0
  %v1321 = vadd.f32 0.0, %v1320
  %v1322 = vpop.f32.mrf.mxu0
  %v1323 = vpop.f32.mrf.mxu0
  %v1324 = vadd.f32 0.0, %v1323
  %v1325 = vpop.f32.mrf.mxu0
  %1326 = vmatprep.mubr.bf16.mxu0 0
  %1327 = vmatmul.mubr.bf16.gmra.mxu0 %v761
  %v1328 = vpop.f32.mrf.mxu0
  %v1329 = vadd.f32 0.0, %v1328
  %v1330 = vpop.f32.mrf.mxu0
  %v1331 = vpop.f32.mrf.mxu0
  %v1332 = vadd.f32 0.0, %v1331
  %v1333 = vpop.f32.mrf.mxu0
  %1334 = vmatprep.mubr.bf16.mxu0 0
  %1335 = vmatmul.mubr.bf16.gmra.mxu0 %v762
  %v1336 = vpop.f32.mrf.mxu0
  %v1337 = vadd.f32 0.0, %v1336
  %v1338 = vpop.f32.mrf.mxu0
  %v1339 = vpop.f32.mrf.mxu0
  %v1340 = vadd.f32 0.0, %v1339
  %v1341 = vpop.f32.mrf.mxu0
  %1342 = vmatprep.mubr.bf16.mxu0 0
  %1343 = vmatmul.mubr.bf16.gmra.mxu0 %v763
  %v1344 = vpop.f32.mrf.mxu0
  %v1345 = vadd.f32 0.0, %v1344
  %v1346 = vpop.f32.mrf.mxu0
  %v1347 = vpop.f32.mrf.mxu0
  %v1348 = vadd.f32 0.0, %v1347
  %v1349 = vpop.f32.mrf.mxu0
  %1350 = vmatprep.mubr.bf16.mxu0 0
  %1351 = vmatmul.mubr.bf16.gmra.mxu0 %v764
  %v1352 = vpop.f32.mrf.mxu0
  %v1353 = vadd.f32 0.0, %v1352
  %v1354 = vpop.f32.mrf.mxu0
  %v1355 = vpop.f32.mrf.mxu0
  %v1356 = vadd.f32 0.0, %v1355
  %v1357 = vpop.f32.mrf.mxu0
  %1358 = vmatprep.mubr.bf16.mxu0 0
  %1359 = vmatmul.mubr.bf16.gmra.mxu0 %v765
  %v1360 = vpop.f32.mrf.mxu0
  %v1361 = vadd.f32 0.0, %v1360
  %v1362 = vpop.f32.mrf.mxu0
  %v1363 = vpop.f32.mrf.mxu0
  %v1364 = vadd.f32 0.0, %v1363
  %v1365 = vpop.f32.mrf.mxu0
  %1366 = vmatprep.mubr.bf16.mxu0 0
  %1367 = vmatmul.mubr.bf16.gmra.mxu0 %v766
  %v1368 = vpop.f32.mrf.mxu0
  %v1369 = vadd.f32 0.0, %v1368
  %v1370 = vpop.f32.mrf.mxu0
  %v1371 = vpop.f32.mrf.mxu0
  %v1372 = vadd.f32 0.0, %v1371
  %v1373 = vpop.f32.mrf.mxu0
  %1374 = vmatprep.mubr.bf16.mxu0 0
  %1375 = vmatmul.mubr.bf16.gmra.mxu0 %v767
  %v1376 = vpop.f32.mrf.mxu0
  %v1377 = vadd.f32 0.0, %v1376
  %v1378 = vpop.f32.mrf.mxu0
  %v1379 = vpop.f32.mrf.mxu0
  %v1380 = vadd.f32 0.0, %v1379
  %v1381 = vpop.f32.mrf.mxu0
  %1382 = vmatprep.mubr.bf16.mxu0 0
  %1383 = vmatmul.mubr.bf16.gmra.mxu0 %v768
  %v1384 = vpop.f32.mrf.mxu0
  %v1385 = vadd.f32 0.0, %v1384
  %v1386 = vpop.f32.mrf.mxu0
  %v1387 = vpop.f32.mrf.mxu0
  %v1388 = vadd.f32 0.0, %v1387
  %v1389 = vpop.f32.mrf.mxu0
  %1390 = vmatprep.mubr.bf16.mxu0 0
  %1391 = vmatmul.mubr.bf16.gmra.mxu0 %v769
  %v1392 = vpop.f32.mrf.mxu0
  %v1393 = vadd.f32 0.0, %v1392
  %v1394 = vpop.f32.mrf.mxu0
  %v1395 = vpop.f32.mrf.mxu0
  %v1396 = vadd.f32 0.0, %v1395
  %v1397 = vpop.f32.mrf.mxu0
  %1398 = vmatprep.mubr.bf16.mxu0 0
  %1399 = vmatmul.mubr.bf16.gmra.mxu0 %v770
  %v1400 = vpop.f32.mrf.mxu0
  %v1401 = vadd.f32 0.0, %v1400
  %v1402 = vpop.f32.mrf.mxu0
  %v1403 = vpop.f32.mrf.mxu0
  %v1404 = vadd.f32 0.0, %v1403
  %v1405 = vpop.f32.mrf.mxu0
  %1406 = vmatprep.mubr.bf16.mxu0 0
  %1407 = vmatmul.mubr.bf16.gmra.mxu0 %v771
  %v1408 = vpop.f32.mrf.mxu0
  %v1409 = vadd.f32 0.0, %v1408
  %v1410 = vpop.f32.mrf.mxu0
  %v1411 = vpop.f32.mrf.mxu0
  %v1412 = vadd.f32 0.0, %v1411
  %v1413 = vpop.f32.mrf.mxu0
  %1414 = vmatprep.mubr.bf16.mxu0 0
  %1415 = vmatmul.mubr.bf16.gmra.mxu0 %v772
  %v1416 = vpop.f32.mrf.mxu0
  %v1417 = vadd.f32 0.0, %v1416
  %v1418 = vpop.f32.mrf.mxu0
  %v1419 = vpop.f32.mrf.mxu0
  %v1420 = vadd.f32 0.0, %v1419
  %v1421 = vpop.f32.mrf.mxu0
  %1422 = vmatprep.mubr.bf16.mxu0 0
  %1423 = vmatmul.mubr.bf16.gmra.mxu0 %v773
  %v1424 = vpop.f32.mrf.mxu0
  %v1425 = vadd.f32 0.0, %v1424
  %v1426 = vpop.f32.mrf.mxu0
  %v1427 = vpop.f32.mrf.mxu0
  %v1428 = vadd.f32 0.0, %v1427
  %v1429 = vpop.f32.mrf.mxu0
  %1430 = vdwg.mxu0
  %v1431 = vadd.f32 %v182, %v921
  %v1432 = vadd.f32 %v183, %v924
  %v1433 = vadd.f32 %v184, %v929
  %v1434 = vadd.f32 %v185, %v932
  %v1435 = vadd.f32 %v186, %v937
  %v1436 = vadd.f32 %v187, %v940
  %v1437 = vadd.f32 %v188, %v945
  %v1438 = vadd.f32 %v189, %v948
  %v1439 = vadd.f32 %v190, %v953
  %v1440 = vadd.f32 %v191, %v956
  %v1441 = vadd.f32 %v192, %v961
  %v1442 = vadd.f32 %v193, %v964
  %v1443 = vadd.f32 %v194, %v969
  %v1444 = vadd.f32 %v195, %v972
  %v1445 = vadd.f32 %v196, %v977
  %v1446 = vadd.f32 %v197, %v980
  %v1447 = vadd.f32 %v198, %v985
  %v1448 = vadd.f32 %v199, %v988
  %v1449 = vadd.f32 %v200, %v993
  %v1450 = vadd.f32 %v201, %v996
  %v1451 = vadd.f32 %v202, %v1001
  %v1452 = vadd.f32 %v203, %v1004
  %v1453 = vadd.f32 %v204, %v1009
  %v1454 = vadd.f32 %v205, %v1012
  %v1455 = vadd.f32 %v206, %v1017
  %v1456 = vadd.f32 %v207, %v1020
  %v1457 = vadd.f32 %v208, %v1025
  %v1458 = vadd.f32 %v209, %v1028
  %v1459 = vadd.f32 %v210, %v1033
  %v1460 = vadd.f32 %v211, %v1036
  %v1461 = vadd.f32 %v212, %v1041
  %v1462 = vadd.f32 %v213, %v1044
  %v1463 = vadd.f32 %v214, %v1049
  %v1464 = vadd.f32 %v215, %v1052
  %v1465 = vadd.f32 %v216, %v1057
  %v1466 = vadd.f32 %v217, %v1060
  %v1467 = vadd.f32 %v218, %v1065
  %v1468 = vadd.f32 %v219, %v1068
  %v1469 = vadd.f32 %v220, %v1073
  %v1470 = vadd.f32 %v221, %v1076
  %v1471 = vadd.f32 %v222, %v1081
  %v1472 = vadd.f32 %v223, %v1084
  %v1473 = vadd.f32 %v224, %v1089
  %v1474 = vadd.f32 %v225, %v1092
  %v1475 = vadd.f32 %v226, %v1097
  %v1476 = vadd.f32 %v227, %v1100
  %v1477 = vadd.f32 %v228, %v1105
  %v1478 = vadd.f32 %v229, %v1108
  %v1479 = vadd.f32 %v230, %v1113
  %v1480 = vadd.f32 %v231, %v1116
  %v1481 = vadd.f32 %v232, %v1121
  %v1482 = vadd.f32 %v233, %v1124
  %v1483 = vadd.f32 %v234, %v1129
  %v1484 = vadd.f32 %v235, %v1132
  %v1485 = vadd.f32 %v236, %v1137
  %v1486 = vadd.f32 %v237, %v1140
  %v1487 = vadd.f32 %v238, %v1145
  %v1488 = vadd.f32 %v239, %v1148
  %v1489 = vadd.f32 %v240, %v1153
  %v1490 = vadd.f32 %v241, %v1156
  %v1491 = vadd.f32 %v242, %v1161
  %v1492 = vadd.f32 %v243, %v1164
  %v1493 = vadd.f32 %v244, %v1169
  %v1494 = vadd.f32 %v245, %v1172
  %v1495 = vadd.f32 %v246, %v1177
  %v1496 = vadd.f32 %v247, %v1180
  %v1497 = vadd.f32 %v248, %v1185
  %v1498 = vadd.f32 %v249, %v1188
  %v1499 = vadd.f32 %v250, %v1193
  %v1500 = vadd.f32 %v251, %v1196
  %v1501 = vadd.f32 %v252, %v1201
  %v1502 = vadd.f32 %v253, %v1204
  %v1503 = vadd.f32 %v254, %v1209
  %v1504 = vadd.f32 %v255, %v1212
  %v1505 = vadd.f32 %v256, %v1217
  %v1506 = vadd.f32 %v257, %v1220
  %v1507 = vadd.f32 %v258, %v1225
  %v1508 = vadd.f32 %v259, %v1228
  %v1509 = vadd.f32 %v260, %v1233
  %v1510 = vadd.f32 %v261, %v1236
  %v1511 = vadd.f32 %v262, %v1241
  %v1512 = vadd.f32 %v263, %v1244
  %v1513 = vadd.f32 %v264, %v1249
  %v1514 = vadd.f32 %v265, %v1252
  %v1515 = vadd.f32 %v266, %v1257
  %v1516 = vadd.f32 %v267, %v1260
  %v1517 = vadd.f32 %v268, %v1265
  %v1518 = vadd.f32 %v269, %v1268
  %v1519 = vadd.f32 %v270, %v1273
  %v1520 = vadd.f32 %v271, %v1276
  %v1521 = vadd.f32 %v272, %v1281
  %v1522 = vadd.f32 %v273, %v1284
  %v1523 = vadd.f32 %v274, %v1289
  %v1524 = vadd.f32 %v275, %v1292
  %v1525 = vadd.f32 %v276, %v1297
  %v1526 = vadd.f32 %v277, %v1300
  %v1527 = vadd.f32 %v278, %v1305
  %v1528 = vadd.f32 %v279, %v1308
  %v1529 = vadd.f32 %v280, %v1313
  %v1530 = vadd.f32 %v281, %v1316
  %v1531 = vadd.f32 %v282, %v1321
  %v1532 = vadd.f32 %v283, %v1324
  %v1533 = vadd.f32 %v284, %v1329
  %v1534 = vadd.f32 %v285, %v1332
  %v1535 = vadd.f32 %v286, %v1337
  %v1536 = vadd.f32 %v287, %v1340
  %v1537 = vadd.f32 %v288, %v1345
  %v1538 = vadd.f32 %v289, %v1348
  %v1539 = vadd.f32 %v290, %v1353
  %v1540 = vadd.f32 %v291, %v1356
  %v1541 = vadd.f32 %v292, %v1361
  %v1542 = vadd.f32 %v293, %v1364
  %v1543 = vadd.f32 %v294, %v1369
  %v1544 = vadd.f32 %v295, %v1372
  %v1545 = vadd.f32 %v296, %v1377
  %v1546 = vadd.f32 %v297, %v1380
  %v1547 = vadd.f32 %v298, %v1385
  %v1548 = vadd.f32 %v299, %v1388
  %v1549 = vadd.f32 %v300, %v1393
  %v1550 = vadd.f32 %v301, %v1396
  %v1551 = vadd.f32 %v302, %v1401
  %v1552 = vadd.f32 %v303, %v1404
  %v1553 = vadd.f32 %v304, %v1409
  %v1554 = vadd.f32 %v305, %v1412
  %v1555 = vadd.f32 %v306, %v1417
  %v1556 = vadd.f32 %v307, %v1420
  %v1557 = vadd.f32 %v308, %v1425
  %v1558 = vadd.f32 %v309, %v1428
  %1559 = vst [vmem:[#allocation2] sm:$0xff] %v1431
  %1560 = vst [vmem:[#allocation2 + $0x8] sm:$0xff] %v1432
  %1561 = vst [vmem:[#allocation2 + $0x10] sm:$0xff] %v1433
  %1562 = vst [vmem:[#allocation2 + $0x18] sm:$0xff] %v1434
  %1563 = vst [vmem:[#allocation2 + $0x20] sm:$0xff] %v1435
  %1564 = vst [vmem:[#allocation2 + $0x28] sm:$0xff] %v1436
  %1565 = vst [vmem:[#allocation2 + $0x30] sm:$0xff] %v1437
  %1566 = vst [vmem:[#allocation2 + $0x38] sm:$0xff] %v1438
  %1567 = vst [vmem:[#allocation2 + $0x40] sm:$0xff] %v1439
  %1568 = vst [vmem:[#allocation2 + $0x48] sm:$0xff] %v1440
  %1569 = vst [vmem:[#allocation2 + $0x50] sm:$0xff] %v1441
  %1570 = vst [vmem:[#allocation2 + $0x58] sm:$0xff] %v1442
  %1571 = vst [vmem:[#allocation2 + $0x60] sm:$0xff] %v1443
  %1572 = vst [vmem:[#allocation2 + $0x68] sm:$0xff] %v1444
  %1573 = vst [vmem:[#allocation2 + $0x70] sm:$0xff] %v1445
  %1574 = vst [vmem:[#allocation2 + $0x78] sm:$0xff] %v1446
  %1575 = vst [vmem:[#allocation2 + $0x80] sm:$0xff] %v1447
  %1576 = vst [vmem:[#allocation2 + $0x88] sm:$0xff] %v1448
  %1577 = vst [vmem:[#allocation2 + $0x90] sm:$0xff] %v1449
  %1578 = vst [vmem:[#allocation2 + $0x98] sm:$0xff] %v1450
  %1579 = vst [vmem:[#allocation2 + $0xa0] sm:$0xff] %v1451
  %1580 = vst [vmem:[#allocation2 + $0xa8] sm:$0xff] %v1452
  %1581 = vst [vmem:[#allocation2 + $0xb0] sm:$0xff] %v1453
  %1582 = vst [vmem:[#allocation2 + $0xb8] sm:$0xff] %v1454
  %1583 = vst [vmem:[#allocation2 + $0xc0] sm:$0xff] %v1455
  %1584 = vst [vmem:[#allocation2 + $0xc8] sm:$0xff] %v1456
  %1585 = vst [vmem:[#allocation2 + $0xd0] sm:$0xff] %v1457
  %1586 = vst [vmem:[#allocation2 + $0xd8] sm:$0xff] %v1458
  %1587 = vst [vmem:[#allocation2 + $0xe0] sm:$0xff] %v1459
  %1588 = vst [vmem:[#allocation2 + $0xe8] sm:$0xff] %v1460
  %1589 = vst [vmem:[#allocation2 + $0xf0] sm:$0xff] %v1461
  %1590 = vst [vmem:[#allocation2 + $0xf8] sm:$0xff] %v1462
  %1591 = vst [vmem:[#allocation2 + $0x100] sm:$0xff] %v1463
  %1592 = vst [vmem:[#allocation2 + $0x108] sm:$0xff] %v1464
  %1593 = vst [vmem:[#allocation2 + $0x110] sm:$0xff] %v1465
  %1594 = vst [vmem:[#allocation2 + $0x118] sm:$0xff] %v1466
  %1595 = vst [vmem:[#allocation2 + $0x120] sm:$0xff] %v1467
  %1596 = vst [vmem:[#allocation2 + $0x128] sm:$0xff] %v1468
  %1597 = vst [vmem:[#allocation2 + $0x130] sm:$0xff] %v1469
  %1598 = vst [vmem:[#allocation2 + $0x138] sm:$0xff] %v1470
  %1599 = vst [vmem:[#allocation2 + $0x140] sm:$0xff] %v1471
  %1600 = vst [vmem:[#allocation2 + $0x148] sm:$0xff] %v1472
  %1601 = vst [vmem:[#allocation2 + $0x150] sm:$0xff] %v1473
  %1602 = vst [vmem:[#allocation2 + $0x158] sm:$0xff] %v1474
  %1603 = vst [vmem:[#allocation2 + $0x160] sm:$0xff] %v1475
  %1604 = vst [vmem:[#allocation2 + $0x168] sm:$0xff] %v1476
  %1605 = vst [vmem:[#allocation2 + $0x170] sm:$0xff] %v1477
  %1606 = vst [vmem:[#allocation2 + $0x178] sm:$0xff] %v1478
  %1607 = vst [vmem:[#allocation2 + $0x180] sm:$0xff] %v1479
  %1608 = vst [vmem:[#allocation2 + $0x188] sm:$0xff] %v1480
  %1609 = vst [vmem:[#allocation2 + $0x190] sm:$0xff] %v1481
  %1610 = vst [vmem:[#allocation2 + $0x198] sm:$0xff] %v1482
  %1611 = vst [vmem:[#allocation2 + $0x1a0] sm:$0xff] %v1483
  %1612 = vst [vmem:[#allocation2 + $0x1a8] sm:$0xff] %v1484
  %1613 = vst [vmem:[#allocation2 + $0x1b0] sm:$0xff] %v1485
  %1614 = vst [vmem:[#allocation2 + $0x1b8] sm:$0xff] %v1486
  %1615 = vst [vmem:[#allocation2 + $0x1c0] sm:$0xff] %v1487
  %1616 = vst [vmem:[#allocation2 + $0x1c8] sm:$0xff] %v1488
  %1617 = vst [vmem:[#allocation2 + $0x1d0] sm:$0xff] %v1489
  %1618 = vst [vmem:[#allocation2 + $0x1d8] sm:$0xff] %v1490
  %1619 = vst [vmem:[#allocation2 + $0x1e0] sm:$0xff] %v1491
  %1620 = vst [vmem:[#allocation2 + $0x1e8] sm:$0xff] %v1492
  %1621 = vst [vmem:[#allocation2 + $0x1f0] sm:$0xff] %v1493
  %1622 = vst [vmem:[#allocation2 + $0x1f8] sm:$0xff] %v1494
  %1623 = vst [vmem:[#allocation2 + $0x200] sm:$0xff] %v1495
  %1624 = vst [vmem:[#allocation2 + $0x208] sm:$0xff] %v1496
  %1625 = vst [vmem:[#allocation2 + $0x210] sm:$0xff] %v1497
  %1626 = vst [vmem:[#allocation2 + $0x218] sm:$0xff] %v1498
  %1627 = vst [vmem:[#allocation2 + $0x220] sm:$0xff] %v1499
  %1628 = vst [vmem:[#allocation2 + $0x228] sm:$0xff] %v1500
  %1629 = vst [vmem:[#allocation2 + $0x230] sm:$0xff] %v1501
  %1630 = vst [vmem:[#allocation2 + $0x238] sm:$0xff] %v1502
  %1631 = vst [vmem:[#allocation2 + $0x240] sm:$0xff] %v1503
  %1632 = vst [vmem:[#allocation2 + $0x248] sm:$0xff] %v1504
  %1633 = vst [vmem:[#allocation2 + $0x250] sm:$0xff] %v1505
  %1634 = vst [vmem:[#allocation2 + $0x258] sm:$0xff] %v1506
  %1635 = vst [vmem:[#allocation2 + $0x260] sm:$0xff] %v1507
  %1636 = vst [vmem:[#allocation2 + $0x268] sm:$0xff] %v1508
  %1637 = vst [vmem:[#allocation2 + $0x270] sm:$0xff] %v1509
  %1638 = vst [vmem:[#allocation2 + $0x278] sm:$0xff] %v1510
  %1639 = vst [vmem:[#allocation2 + $0x280] sm:$0xff] %v1511
  %1640 = vst [vmem:[#allocation2 + $0x288] sm:$0xff] %v1512
  %1641 = vst [vmem:[#allocation2 + $0x290] sm:$0xff] %v1513
  %1642 = vst [vmem:[#allocation2 + $0x298] sm:$0xff] %v1514
  %1643 = vst [vmem:[#allocation2 + $0x2a0] sm:$0xff] %v1515
  %1644 = vst [vmem:[#allocation2 + $0x2a8] sm:$0xff] %v1516
  %1645 = vst [vmem:[#allocation2 + $0x2b0] sm:$0xff] %v1517
  %1646 = vst [vmem:[#allocation2 + $0x2b8] sm:$0xff] %v1518
  %1647 = vst [vmem:[#allocation2 + $0x2c0] sm:$0xff] %v1519
  %1648 = vst [vmem:[#allocation2 + $0x2c8] sm:$0xff] %v1520
  %1649 = vst [vmem:[#allocation2 + $0x2d0] sm:$0xff] %v1521
  %1650 = vst [vmem:[#allocation2 + $0x2d8] sm:$0xff] %v1522
  %1651 = vst [vmem:[#allocation2 + $0x2e0] sm:$0xff] %v1523
  %1652 = vst [vmem:[#allocation2 + $0x2e8] sm:$0xff] %v1524
  %1653 = vst [vmem:[#allocation2 + $0x2f0] sm:$0xff] %v1525
  %1654 = vst [vmem:[#allocation2 + $0x2f8] sm:$0xff] %v1526
  %1655 = vst [vmem:[#allocation2 + $0x300] sm:$0xff] %v1527
  %1656 = vst [vmem:[#allocation2 + $0x308] sm:$0xff] %v1528
  %1657 = vst [vmem:[#allocation2 + $0x310] sm:$0xff] %v1529
  %1658 = vst [vmem:[#allocation2 + $0x318] sm:$0xff] %v1530
  %1659 = vst [vmem:[#allocation2 + $0x320] sm:$0xff] %v1531
  %1660 = vst [vmem:[#allocation2 + $0x328] sm:$0xff] %v1532
  %1661 = vst [vmem:[#allocation2 + $0x330] sm:$0xff] %v1533
  %1662 = vst [vmem:[#allocation2 + $0x338] sm:$0xff] %v1534
  %1663 = vst [vmem:[#allocation2 + $0x340] sm:$0xff] %v1535
  %1664 = vst [vmem:[#allocation2 + $0x348] sm:$0xff] %v1536
  %1665 = vst [vmem:[#allocation2 + $0x350] sm:$0xff] %v1537
  %1666 = vst [vmem:[#allocation2 + $0x358] sm:$0xff] %v1538
  %1667 = vst [vmem:[#allocation2 + $0x360] sm:$0xff] %v1539
  %1668 = vst [vmem:[#allocation2 + $0x368] sm:$0xff] %v1540
  %1669 = vst [vmem:[#allocation2 + $0x370] sm:$0xff] %v1541
  %1670 = vst [vmem:[#allocation2 + $0x378] sm:$0xff] %v1542
  %1671 = vst [vmem:[#allocation2 + $0x380] sm:$0xff] %v1543
  %1672 = vst [vmem:[#allocation2 + $0x388] sm:$0xff] %v1544
  %1673 = vst [vmem:[#allocation2 + $0x390] sm:$0xff] %v1545
  %1674 = vst [vmem:[#allocation2 + $0x398] sm:$0xff] %v1546
  %1675 = vst [vmem:[#allocation2 + $0x3a0] sm:$0xff] %v1547
  %1676 = vst [vmem:[#allocation2 + $0x3a8] sm:$0xff] %v1548
  %1677 = vst [vmem:[#allocation2 + $0x3b0] sm:$0xff] %v1549
  %1678 = vst [vmem:[#allocation2 + $0x3b8] sm:$0xff] %v1550
  %1679 = vst [vmem:[#allocation2 + $0x3c0] sm:$0xff] %v1551
  %1680 = vst [vmem:[#allocation2 + $0x3c8] sm:$0xff] %v1552
  %1681 = vst [vmem:[#allocation2 + $0x3d0] sm:$0xff] %v1553
  %1682 = vst [vmem:[#allocation2 + $0x3d8] sm:$0xff] %v1554
  %1683 = vst [vmem:[#allocation2 + $0x3e0] sm:$0xff] %v1555
  %1684 = vst [vmem:[#allocation2 + $0x3e8] sm:$0xff] %v1556
  %1685 = vst [vmem:[#allocation2 + $0x3f0] sm:$0xff] %v1557
  %1686 = vst [vmem:[#allocation2 + $0x3f8] sm:$0xff] %v1558
  // Predicated region
  $region18: #{sparse_conv3d_pack_forward.1} parent=0 // pred_check
    %p1687 = pneg %p43
  $region19: #{sparse_conv3d_pack_forward.1} parent=0 // pred_check_branch
    %1689 = sbr.rel (%p1687) target = $region21
  $region20: #{sparse_conv3d_pack_forward.1} parent=0 // pred_region
    %v1690 = vld [vmem:[#allocation2] sm:$0xff]
    %v1691 = vld [vmem:[#allocation2 + $0x8] sm:$0xff]
    %v1692 = vld [vmem:[#allocation2 + $0x10] sm:$0xff]
    %v1693 = vld [vmem:[#allocation2 + $0x18] sm:$0xff]
    %v1694 = vld [vmem:[#allocation2 + $0x20] sm:$0xff]
    %v1695 = vld [vmem:[#allocation2 + $0x28] sm:$0xff]
    %v1696 = vld [vmem:[#allocation2 + $0x30] sm:$0xff]
    %v1697 = vld [vmem:[#allocation2 + $0x38] sm:$0xff]
    %v1698 = vld [vmem:[#allocation2 + $0x40] sm:$0xff]
    %v1699 = vld [vmem:[#allocation2 + $0x48] sm:$0xff]
    %v1700 = vld [vmem:[#allocation2 + $0x50] sm:$0xff]
    %v1701 = vld [vmem:[#allocation2 + $0x58] sm:$0xff]
    %v1702 = vld [vmem:[#allocation2 + $0x60] sm:$0xff]
    %v1703 = vld [vmem:[#allocation2 + $0x68] sm:$0xff]
    %v1704 = vld [vmem:[#allocation2 + $0x70] sm:$0xff]
    %v1705 = vld [vmem:[#allocation2 + $0x78] sm:$0xff]
    %v1706 = vld [vmem:[#allocation2 + $0x80] sm:$0xff]
    %v1707 = vld [vmem:[#allocation2 + $0x88] sm:$0xff]
    %v1708 = vld [vmem:[#allocation2 + $0x90] sm:$0xff]
    %v1709 = vld [vmem:[#allocation2 + $0x98] sm:$0xff]
    %v1710 = vld [vmem:[#allocation2 + $0xa0] sm:$0xff]
    %v1711 = vld [vmem:[#allocation2 + $0xa8] sm:$0xff]
    %v1712 = vld [vmem:[#allocation2 + $0xb0] sm:$0xff]
    %v1713 = vld [vmem:[#allocation2 + $0xb8] sm:$0xff]
    %v1714 = vld [vmem:[#allocation2 + $0xc0] sm:$0xff]
    %v1715 = vld [vmem:[#allocation2 + $0xc8] sm:$0xff]
    %v1716 = vld [vmem:[#allocation2 + $0xd0] sm:$0xff]
    %v1717 = vld [vmem:[#allocation2 + $0xd8] sm:$0xff]
    %v1718 = vld [vmem:[#allocation2 + $0xe0] sm:$0xff]
    %v1719 = vld [vmem:[#allocation2 + $0xe8] sm:$0xff]
    %v1720 = vld [vmem:[#allocation2 + $0xf0] sm:$0xff]
    %v1721 = vld [vmem:[#allocation2 + $0xf8] sm:$0xff]
    %v1722 = vld [vmem:[#allocation2 + $0x100] sm:$0xff]
    %v1723 = vld [vmem:[#allocation2 + $0x108] sm:$0xff]
    %v1724 = vld [vmem:[#allocation2 + $0x110] sm:$0xff]
    %v1725 = vld [vmem:[#allocation2 + $0x118] sm:$0xff]
    %v1726 = vld [vmem:[#allocation2 + $0x120] sm:$0xff]
    %v1727 = vld [vmem:[#allocation2 + $0x128] sm:$0xff]
    %v1728 = vld [vmem:[#allocation2 + $0x130] sm:$0xff]
    %v1729 = vld [vmem:[#allocation2 + $0x138] sm:$0xff]
    %v1730 = vld [vmem:[#allocation2 + $0x140] sm:$0xff]
    %v1731 = vld [vmem:[#allocation2 + $0x148] sm:$0xff]
    %v1732 = vld [vmem:[#allocation2 + $0x150] sm:$0xff]
    %v1733 = vld [vmem:[#allocation2 + $0x158] sm:$0xff]
    %v1734 = vld [vmem:[#allocation2 + $0x160] sm:$0xff]
    %v1735 = vld [vmem:[#allocation2 + $0x168] sm:$0xff]
    %v1736 = vld [vmem:[#allocation2 + $0x170] sm:$0xff]
    %v1737 = vld [vmem:[#allocation2 + $0x178] sm:$0xff]
    %v1738 = vld [vmem:[#allocation2 + $0x180] sm:$0xff]
    %v1739 = vld [vmem:[#allocation2 + $0x188] sm:$0xff]
    %v1740 = vld [vmem:[#allocation2 + $0x190] sm:$0xff]
    %v1741 = vld [vmem:[#allocation2 + $0x198] sm:$0xff]
    %v1742 = vld [vmem:[#allocation2 + $0x1a0] sm:$0xff]
    %v1743 = vld [vmem:[#allocation2 + $0x1a8] sm:$0xff]
    %v1744 = vld [vmem:[#allocation2 + $0x1b0] sm:$0xff]
    %v1745 = vld [vmem:[#allocation2 + $0x1b8] sm:$0xff]
    %v1746 = vld [vmem:[#allocation2 + $0x1c0] sm:$0xff]
    %v1747 = vld [vmem:[#allocation2 + $0x1c8] sm:$0xff]
    %v1748 = vld [vmem:[#allocation2 + $0x1d0] sm:$0xff]
    %v1749 = vld [vmem:[#allocation2 + $0x1d8] sm:$0xff]
    %v1750 = vld [vmem:[#allocation2 + $0x1e0] sm:$0xff]
    %v1751 = vld [vmem:[#allocation2 + $0x1e8] sm:$0xff]
    %v1752 = vld [vmem:[#allocation2 + $0x1f0] sm:$0xff]
    %v1753 = vld [vmem:[#allocation2 + $0x1f8] sm:$0xff]
    %v1754 = vld [vmem:[#allocation2 + $0x200] sm:$0xff]
    %v1755 = vld [vmem:[#allocation2 + $0x208] sm:$0xff]
    %v1756 = vld [vmem:[#allocation2 + $0x210] sm:$0xff]
    %v1757 = vld [vmem:[#allocation2 + $0x218] sm:$0xff]
    %v1758 = vld [vmem:[#allocation2 + $0x220] sm:$0xff]
    %v1759 = vld [vmem:[#allocation2 + $0x228] sm:$0xff]
    %v1760 = vld [vmem:[#allocation2 + $0x230] sm:$0xff]
    %v1761 = vld [vmem:[#allocation2 + $0x238] sm:$0xff]
    %v1762 = vld [vmem:[#allocation2 + $0x240] sm:$0xff]
    %v1763 = vld [vmem:[#allocation2 + $0x248] sm:$0xff]
    %v1764 = vld [vmem:[#allocation2 + $0x250] sm:$0xff]
    %v1765 = vld [vmem:[#allocation2 + $0x258] sm:$0xff]
    %v1766 = vld [vmem:[#allocation2 + $0x260] sm:$0xff]
    %v1767 = vld [vmem:[#allocation2 + $0x268] sm:$0xff]
    %v1768 = vld [vmem:[#allocation2 + $0x270] sm:$0xff]
    %v1769 = vld [vmem:[#allocation2 + $0x278] sm:$0xff]
    %v1770 = vld [vmem:[#allocation2 + $0x280] sm:$0xff]
    %v1771 = vld [vmem:[#allocation2 + $0x288] sm:$0xff]
    %v1772 = vld [vmem:[#allocation2 + $0x290] sm:$0xff]
    %v1773 = vld [vmem:[#allocation2 + $0x298] sm:$0xff]
    %v1774 = vld [vmem:[#allocation2 + $0x2a0] sm:$0xff]
    %v1775 = vld [vmem:[#allocation2 + $0x2a8] sm:$0xff]
    %v1776 = vld [vmem:[#allocation2 + $0x2b0] sm:$0xff]
    %v1777 = vld [vmem:[#allocation2 + $0x2b8] sm:$0xff]
    %v1778 = vld [vmem:[#allocation2 + $0x2c0] sm:$0xff]
    %v1779 = vld [vmem:[#allocation2 + $0x2c8] sm:$0xff]
    %v1780 = vld [vmem:[#allocation2 + $0x2d0] sm:$0xff]
    %v1781 = vld [vmem:[#allocation2 + $0x2d8] sm:$0xff]
    %v1782 = vld [vmem:[#allocation2 + $0x2e0] sm:$0xff]
    %v1783 = vld [vmem:[#allocation2 + $0x2e8] sm:$0xff]
    %v1784 = vld [vmem:[#allocation2 + $0x2f0] sm:$0xff]
    %v1785 = vld [vmem:[#allocation2 + $0x2f8] sm:$0xff]
    %v1786 = vld [vmem:[#allocation2 + $0x300] sm:$0xff]
    %v1787 = vld [vmem:[#allocation2 + $0x308] sm:$0xff]
    %v1788 = vld [vmem:[#allocation2 + $0x310] sm:$0xff]
    %v1789 = vld [vmem:[#allocation2 + $0x318] sm:$0xff]
    %v1790 = vld [vmem:[#allocation2 + $0x320] sm:$0xff]
    %v1791 = vld [vmem:[#allocation2 + $0x328] sm:$0xff]
    %v1792 = vld [vmem:[#allocation2 + $0x330] sm:$0xff]
    %v1793 = vld [vmem:[#allocation2 + $0x338] sm:$0xff]
    %v1794 = vld [vmem:[#allocation2 + $0x340] sm:$0xff]
    %v1795 = vld [vmem:[#allocation2 + $0x348] sm:$0xff]
    %v1796 = vld [vmem:[#allocation2 + $0x350] sm:$0xff]
    %v1797 = vld [vmem:[#allocation2 + $0x358] sm:$0xff]
    %v1798 = vld [vmem:[#allocation2 + $0x360] sm:$0xff]
    %v1799 = vld [vmem:[#allocation2 + $0x368] sm:$0xff]
    %v1800 = vld [vmem:[#allocation2 + $0x370] sm:$0xff]
    %v1801 = vld [vmem:[#allocation2 + $0x378] sm:$0xff]
    %v1802 = vld [vmem:[#allocation2 + $0x380] sm:$0xff]
    %v1803 = vld [vmem:[#allocation2 + $0x388] sm:$0xff]
    %v1804 = vld [vmem:[#allocation2 + $0x390] sm:$0xff]
    %v1805 = vld [vmem:[#allocation2 + $0x398] sm:$0xff]
    %v1806 = vld [vmem:[#allocation2 + $0x3a0] sm:$0xff]
    %v1807 = vld [vmem:[#allocation2 + $0x3a8] sm:$0xff]
    %v1808 = vld [vmem:[#allocation2 + $0x3b0] sm:$0xff]
    %v1809 = vld [vmem:[#allocation2 + $0x3b8] sm:$0xff]
    %v1810 = vld [vmem:[#allocation2 + $0x3c0] sm:$0xff]
    %v1811 = vld [vmem:[#allocation2 + $0x3c8] sm:$0xff]
    %v1812 = vld [vmem:[#allocation2 + $0x3d0] sm:$0xff]
    %v1813 = vld [vmem:[#allocation2 + $0x3d8] sm:$0xff]
    %v1814 = vld [vmem:[#allocation2 + $0x3e0] sm:$0xff]
    %v1815 = vld [vmem:[#allocation2 + $0x3e8] sm:$0xff]
    %v1816 = vld [vmem:[#allocation2 + $0x3f0] sm:$0xff]
    %v1817 = vld [vmem:[#allocation2 + $0x3f8] sm:$0xff]
    %1818 = vst [vmem:[%s40] sm:$0xff] %v1690
    %1819 = vst [vmem:[%s40 + $0x8] sm:$0xff] %v1691
    %1820 = vst [vmem:[%s40 + $0x10] sm:$0xff] %v1692
    %1821 = vst [vmem:[%s40 + $0x18] sm:$0xff] %v1693
    %1822 = vst [vmem:[%s40 + $0x20] sm:$0xff] %v1694
    %1823 = vst [vmem:[%s40 + $0x28] sm:$0xff] %v1695
    %1824 = vst [vmem:[%s40 + $0x30] sm:$0xff] %v1696
    %1825 = vst [vmem:[%s40 + $0x38] sm:$0xff] %v1697
    %1826 = vst [vmem:[%s40 + $0x40] sm:$0xff] %v1698
    %1827 = vst [vmem:[%s40 + $0x48] sm:$0xff] %v1699
    %1828 = vst [vmem:[%s40 + $0x50] sm:$0xff] %v1700
    %1829 = vst [vmem:[%s40 + $0x58] sm:$0xff] %v1701
    %1830 = vst [vmem:[%s40 + $0x60] sm:$0xff] %v1702
    %1831 = vst [vmem:[%s40 + $0x68] sm:$0xff] %v1703
    %1832 = vst [vmem:[%s40 + $0x70] sm:$0xff] %v1704
    %1833 = vst [vmem:[%s40 + $0x78] sm:$0xff] %v1705
    %1834 = vst [vmem:[%s40 + $0x80] sm:$0xff] %v1706
    %1835 = vst [vmem:[%s40 + $0x88] sm:$0xff] %v1707
    %1836 = vst [vmem:[%s40 + $0x90] sm:$0xff] %v1708
    %1837 = vst [vmem:[%s40 + $0x98] sm:$0xff] %v1709
    %1838 = vst [vmem:[%s40 + $0xa0] sm:$0xff] %v1710
    %1839 = vst [vmem:[%s40 + $0xa8] sm:$0xff] %v1711
    %1840 = vst [vmem:[%s40 + $0xb0] sm:$0xff] %v1712
    %1841 = vst [vmem:[%s40 + $0xb8] sm:$0xff] %v1713
    %1842 = vst [vmem:[%s40 + $0xc0] sm:$0xff] %v1714
    %1843 = vst [vmem:[%s40 + $0xc8] sm:$0xff] %v1715
    %1844 = vst [vmem:[%s40 + $0xd0] sm:$0xff] %v1716
    %1845 = vst [vmem:[%s40 + $0xd8] sm:$0xff] %v1717
    %1846 = vst [vmem:[%s40 + $0xe0] sm:$0xff] %v1718
    %1847 = vst [vmem:[%s40 + $0xe8] sm:$0xff] %v1719
    %1848 = vst [vmem:[%s40 + $0xf0] sm:$0xff] %v1720
    %1849 = vst [vmem:[%s40 + $0xf8] sm:$0xff] %v1721
    %1850 = vst [vmem:[%s40 + $0x100] sm:$0xff] %v1722
    %1851 = vst [vmem:[%s40 + $0x108] sm:$0xff] %v1723
    %1852 = vst [vmem:[%s40 + $0x110] sm:$0xff] %v1724
    %1853 = vst [vmem:[%s40 + $0x118] sm:$0xff] %v1725
    %1854 = vst [vmem:[%s40 + $0x120] sm:$0xff] %v1726
    %1855 = vst [vmem:[%s40 + $0x128] sm:$0xff] %v1727
    %1856 = vst [vmem:[%s40 + $0x130] sm:$0xff] %v1728
    %1857 = vst [vmem:[%s40 + $0x138] sm:$0xff] %v1729
    %1858 = vst [vmem:[%s40 + $0x140] sm:$0xff] %v1730
    %1859 = vst [vmem:[%s40 + $0x148] sm:$0xff] %v1731
    %1860 = vst [vmem:[%s40 + $0x150] sm:$0xff] %v1732
    %1861 = vst [vmem:[%s40 + $0x158] sm:$0xff] %v1733
    %1862 = vst [vmem:[%s40 + $0x160] sm:$0xff] %v1734
    %1863 = vst [vmem:[%s40 + $0x168] sm:$0xff] %v1735
    %1864 = vst [vmem:[%s40 + $0x170] sm:$0xff] %v1736
    %1865 = vst [vmem:[%s40 + $0x178] sm:$0xff] %v1737
    %1866 = vst [vmem:[%s40 + $0x180] sm:$0xff] %v1738
    %1867 = vst [vmem:[%s40 + $0x188] sm:$0xff] %v1739
    %1868 = vst [vmem:[%s40 + $0x190] sm:$0xff] %v1740
    %1869 = vst [vmem:[%s40 + $0x198] sm:$0xff] %v1741
    %1870 = vst [vmem:[%s40 + $0x1a0] sm:$0xff] %v1742
    %1871 = vst [vmem:[%s40 + $0x1a8] sm:$0xff] %v1743
    %1872 = vst [vmem:[%s40 + $0x1b0] sm:$0xff] %v1744
    %1873 = vst [vmem:[%s40 + $0x1b8] sm:$0xff] %v1745
    %1874 = vst [vmem:[%s40 + $0x1c0] sm:$0xff] %v1746
    %1875 = vst [vmem:[%s40 + $0x1c8] sm:$0xff] %v1747
    %1876 = vst [vmem:[%s40 + $0x1d0] sm:$0xff] %v1748
    %1877 = vst [vmem:[%s40 + $0x1d8] sm:$0xff] %v1749
    %1878 = vst [vmem:[%s40 + $0x1e0] sm:$0xff] %v1750
    %1879 = vst [vmem:[%s40 + $0x1e8] sm:$0xff] %v1751
    %1880 = vst [vmem:[%s40 + $0x1f0] sm:$0xff] %v1752
    %1881 = vst [vmem:[%s40 + $0x1f8] sm:$0xff] %v1753
    %1882 = vst [vmem:[%s40 + $0x200] sm:$0xff] %v1754
    %1883 = vst [vmem:[%s40 + $0x208] sm:$0xff] %v1755
    %1884 = vst [vmem:[%s40 + $0x210] sm:$0xff] %v1756
    %1885 = vst [vmem:[%s40 + $0x218] sm:$0xff] %v1757
    %1886 = vst [vmem:[%s40 + $0x220] sm:$0xff] %v1758
    %1887 = vst [vmem:[%s40 + $0x228] sm:$0xff] %v1759
    %1888 = vst [vmem:[%s40 + $0x230] sm:$0xff] %v1760
    %1889 = vst [vmem:[%s40 + $0x238] sm:$0xff] %v1761
    %1890 = vst [vmem:[%s40 + $0x240] sm:$0xff] %v1762
    %1891 = vst [vmem:[%s40 + $0x248] sm:$0xff] %v1763
    %1892 = vst [vmem:[%s40 + $0x250] sm:$0xff] %v1764
    %1893 = vst [vmem:[%s40 + $0x258] sm:$0xff] %v1765
    %1894 = vst [vmem:[%s40 + $0x260] sm:$0xff] %v1766
    %1895 = vst [vmem:[%s40 + $0x268] sm:$0xff] %v1767
    %1896 = vst [vmem:[%s40 + $0x270] sm:$0xff] %v1768
    %1897 = vst [vmem:[%s40 + $0x278] sm:$0xff] %v1769
    %1898 = vst [vmem:[%s40 + $0x280] sm:$0xff] %v1770
    %1899 = vst [vmem:[%s40 + $0x288] sm:$0xff] %v1771
    %1900 = vst [vmem:[%s40 + $0x290] sm:$0xff] %v1772
    %1901 = vst [vmem:[%s40 + $0x298] sm:$0xff] %v1773
    %1902 = vst [vmem:[%s40 + $0x2a0] sm:$0xff] %v1774
    %1903 = vst [vmem:[%s40 + $0x2a8] sm:$0xff] %v1775
    %1904 = vst [vmem:[%s40 + $0x2b0] sm:$0xff] %v1776
    %1905 = vst [vmem:[%s40 + $0x2b8] sm:$0xff] %v1777
    %1906 = vst [vmem:[%s40 + $0x2c0] sm:$0xff] %v1778
    %1907 = vst [vmem:[%s40 + $0x2c8] sm:$0xff] %v1779
    %1908 = vst [vmem:[%s40 + $0x2d0] sm:$0xff] %v1780
    %1909 = vst [vmem:[%s40 + $0x2d8] sm:$0xff] %v1781
    %1910 = vst [vmem:[%s40 + $0x2e0] sm:$0xff] %v1782
    %1911 = vst [vmem:[%s40 + $0x2e8] sm:$0xff] %v1783
    %1912 = vst [vmem:[%s40 + $0x2f0] sm:$0xff] %v1784
    %1913 = vst [vmem:[%s40 + $0x2f8] sm:$0xff] %v1785
    %1914 = vst [vmem:[%s40 + $0x300] sm:$0xff] %v1786
    %1915 = vst [vmem:[%s40 + $0x308] sm:$0xff] %v1787
    %1916 = vst [vmem:[%s40 + $0x310] sm:$0xff] %v1788
    %1917 = vst [vmem:[%s40 + $0x318] sm:$0xff] %v1789
    %1918 = vst [vmem:[%s40 + $0x320] sm:$0xff] %v1790
    %1919 = vst [vmem:[%s40 + $0x328] sm:$0xff] %v1791
    %1920 = vst [vmem:[%s40 + $0x330] sm:$0xff] %v1792
    %1921 = vst [vmem:[%s40 + $0x338] sm:$0xff] %v1793
    %1922 = vst [vmem:[%s40 + $0x340] sm:$0xff] %v1794
    %1923 = vst [vmem:[%s40 + $0x348] sm:$0xff] %v1795
    %1924 = vst [vmem:[%s40 + $0x350] sm:$0xff] %v1796
    %1925 = vst [vmem:[%s40 + $0x358] sm:$0xff] %v1797
    %1926 = vst [vmem:[%s40 + $0x360] sm:$0xff] %v1798
    %1927 = vst [vmem:[%s40 + $0x368] sm:$0xff] %v1799
    %1928 = vst [vmem:[%s40 + $0x370] sm:$0xff] %v1800
    %1929 = vst [vmem:[%s40 + $0x378] sm:$0xff] %v1801
    %1930 = vst [vmem:[%s40 + $0x380] sm:$0xff] %v1802
    %1931 = vst [vmem:[%s40 + $0x388] sm:$0xff] %v1803
    %1932 = vst [vmem:[%s40 + $0x390] sm:$0xff] %v1804
    %1933 = vst [vmem:[%s40 + $0x398] sm:$0xff] %v1805
    %1934 = vst [vmem:[%s40 + $0x3a0] sm:$0xff] %v1806
    %1935 = vst [vmem:[%s40 + $0x3a8] sm:$0xff] %v1807
    %1936 = vst [vmem:[%s40 + $0x3b0] sm:$0xff] %v1808
    %1937 = vst [vmem:[%s40 + $0x3b8] sm:$0xff] %v1809
    %1938 = vst [vmem:[%s40 + $0x3c0] sm:$0xff] %v1810
    %1939 = vst [vmem:[%s40 + $0x3c8] sm:$0xff] %v1811
    %1940 = vst [vmem:[%s40 + $0x3d0] sm:$0xff] %v1812
    %1941 = vst [vmem:[%s40 + $0x3d8] sm:$0xff] %v1813
    %1942 = vst [vmem:[%s40 + $0x3e0] sm:$0xff] %v1814
    %1943 = vst [vmem:[%s40 + $0x3e8] sm:$0xff] %v1815
    %1944 = vst [vmem:[%s40 + $0x3f0] sm:$0xff] %v1816
    %1945 = vst [vmem:[%s40 + $0x3f8] sm:$0xff] %v1817
  $region21: #{sparse_conv3d_pack_forward.1} parent=0 // pred_fallthru
    _
  %s1946 = sadd.s32 0, 0
  %p1947 = scmp.lt.s32.totalorder %s1946, 0
  %s1948 = scalar_select %p1947, %s1946, 0
  %s1949 = smul.addr %s1948, 8
  %s1950 = scalar_lea.vmem %s3, %s1949
  // Predicated region
  $region22: #{sparse_conv3d_pack_forward.1} parent=0 // pred_check
    _
  $region23: #{sparse_conv3d_pack_forward.1} parent=0 // pred_check_branch
    %1952 = sbr.rel (0) target = $region25
  $region24: #{sparse_conv3d_pack_forward.1} parent=0 // pred_region
    %s1953 = sadd.s32 0, 0
  $region25: #{sparse_conv3d_pack_forward.1} parent=0 // pred_fallthru
    _
  // Predicated region
  $region26: #{sparse_conv3d_pack_forward.1} parent=0 // pred_check
    _
  $region27: #{sparse_conv3d_pack_forward.1} parent=0 // pred_check_branch
    %1955 = sbr.rel (0) target = $region29
  $region28: #{sparse_conv3d_pack_forward.1} parent=0 // pred_region
    %s1956 = sadd.s32 0, 0
    %p1957 = scmp.lt.s32.totalorder %s1956, 0
    %s1958 = scalar_select %p1957, %s1956, 0
    %s1959 = smul.addr %s1958, 8
    %s1960 = scalar_lea.vmem %s3, %s1959
  $region29: #{sparse_conv3d_pack_forward.1} parent=0 // pred_fallthru
    _

</llo_original>
